<compile_context>
chip_gen: v5e
topology: v5e:2x2
jax: 0.10.0
libtpu: 0.0.40
codegen_flags: <defaults>
</compile_context>

<pallas_src>
import functools
import math

import jax
import jax.numpy as jnp
import numpy as np
from jax.experimental import pallas as pl
from jax.experimental.pallas import tpu as pltpu

_LANE = 128
_MAX_TILE_LANES = 2048   # fused cells per grid step; bounds VMEM at production sizes


# ---------------------------------------------------------------------------
# In-kernel helpers
# ---------------------------------------------------------------------------
def _fast_recip(d):
    # EUP approx reciprocal + one Newton step (~1e-7 rel error); keeps divides off VALU.
    r = pl.reciprocal(d, approx=True)
    return r * (2.0 - d * r)


def _atan_f32(x):
    # TODO(synk): lax.atan has no Pallas-TPU (Mosaic) lowering; Cephes atanf range
    # reduction + polynomial (float32-accurate, ~1e-6 abs error).
    sgn = jnp.where(x < 0.0, -1.0, 1.0)
    ax = jnp.abs(x)
    big = ax > 2.414213562373095                       # tan(3*pi/8)
    mid = jnp.logical_and(ax > 0.4142135623730951, jnp.logical_not(big))  # tan(pi/8)
    y0 = jnp.where(big, 0.5 * math.pi, jnp.where(mid, 0.25 * math.pi, 0.0))
    xr = jnp.where(big, -_fast_recip(jnp.maximum(ax, 1e-30)),
                   jnp.where(mid, (ax - 1.0) * _fast_recip(ax + 1.0), ax))
    z = xr * xr
    p = ((8.05374449538e-2 * z - 1.38776856032e-1) * z + 1.99777106478e-1) * z \
        - 3.33329491539e-1
    return sgn * (y0 + p * z * xr + xr)


def _softplus(z):
    # softplus(z) = -log(1 - sigmoid(z)) ; softplus(-z) = softplus(z) - z
    return jnp.maximum(z, 0.0) + jnp.log(1.0 + jnp.exp(-jnp.abs(z)))


def _sigmoid(z):
    return _fast_recip(1.0 + jnp.exp(-z))


# ---------------------------------------------------------------------------
# Kernel: one (batch, M-tile) grid step of one detection scale
# ---------------------------------------------------------------------------
def _yolo_scale_kernel(conv_ref, lab_ref, oa_ref, tb_ref,
                       ciou_out, conf_out, prob_out,
                       *, stride, inv_in2, iou_thresh, num_gt):
    b = pl.program_id(0)
    m = pl.program_id(1)
    num_class = conv_ref.shape[1] - 5
    plane = conv_ref.shape[2:]          # (TR, 128)

    # raw head / label / offset planes, each (TR, 128)
    tx = conv_ref[0, 0]
    ty = conv_ref[0, 1]
    tw = conv_ref[0, 2]
    th = conv_ref[0, 3]
    tconf = conv_ref[0, 4]
    lx = lab_ref[0, 0]
    ly = lab_ref[0, 1]
    lw = lab_ref[0, 2]
    lh = lab_ref[0, 3]
    respond = lab_ref[0, 4]
    off_x = oa_ref[0]
    off_y = oa_ref[1]
    anc_w = oa_ref[2]
    anc_h = oa_ref[3]
    valid = oa_ref[4]                   # 1.0 for real cells, 0.0 for lane padding

    # ---- decode ----
    px = (_sigmoid(tx) + off_x) * stride
    py = (_sigmoid(ty) + off_y) * stride
    pw = jnp.exp(tw) * anc_w
    ph = jnp.exp(th) * anc_h

    # ---- CIoU(pred, label) ----
    p_x0 = px - 0.5 * pw
    p_x1 = px + 0.5 * pw
    p_y0 = py - 0.5 * ph
    p_y1 = py + 0.5 * ph
    l_x0 = lx - 0.5 * lw
    l_x1 = lx + 0.5 * lw
    l_y0 = ly - 0.5 * lh
    l_y1 = ly + 0.5 * lh
    b1x0 = jnp.minimum(p_x0, p_x1)
    b1x1 = jnp.maximum(p_x0, p_x1)
    b1y0 = jnp.minimum(p_y0, p_y1)
    b1y1 = jnp.maximum(p_y0, p_y1)
    b2x0 = jnp.minimum(l_x0, l_x1)
    b2x1 = jnp.maximum(l_x0, l_x1)
    b2y0 = jnp.minimum(l_y0, l_y1)
    b2y1 = jnp.maximum(l_y0, l_y1)
    area1 = (b1x1 - b1x0) * (b1y1 - b1y0)
    area2 = (b2x1 - b2x0) * (b2y1 - b2y0)
    iw = jnp.maximum(jnp.minimum(b1x1, b2x1) - jnp.maximum(b1x0, b2x0), 0.0)
    ih = jnp.maximum(jnp.minimum(b1y1, b2y1) - jnp.maximum(b1y0, b2y0), 0.0)
    inter = iw * ih
    union = area1 + area2 - inter
    iou = inter * _fast_recip(union + 1e-9)
    ew = jnp.maximum(b1x1, b2x1) - jnp.minimum(b1x0, b2x0)
    eh = jnp.maximum(b1y1, b2y1) - jnp.minimum(b1y0, b2y0)
    c2 = ew * ew + eh * eh
    dx = px - lx
    dy = py - ly
    p2 = dx * dx + dy * dy
    # folded atan: atan(a) - atan(b) == atan((a-b)/(1+ab)) since a, b >= 0
    a_r = pw * _fast_recip(ph + 1e-9)
    b_r = lw * _fast_recip(lh + 1e-9)
    da = _atan_f32((a_r - b_r) * _fast_recip(1.0 + a_r * b_r))
    v = (4.0 / (math.pi ** 2)) * da * da
    alpha = v * _fast_recip(1.0 - iou + v)
    ciou = iou - p2 * _fast_recip(c2) - alpha * v
    bbox_loss_scale = 2.0 - lw * lh * inv_in2
    ciou_loss = respond * bbox_loss_scale * (1.0 - ciou)

    # ---- class-probability loss (BCE-with-logits, softplus form) ----
    prob_acc = jnp.zeros(plane, jnp.float32)
    for c in range(num_class):
        z = conv_ref[0, 5 + c]
        y = lab_ref[0, 5 + c]
        # y*softplus(-z) + (1-y)*softplus(z) == softplus(z) - y*z
        prob_acc = prob_acc + (_softplus(z) - y * z)
    prob_loss = respond * prob_acc

    # ---- confidence loss: running max IoU of every pred box vs all GT boxes ----
    area_p = pw * ph
    max_iou = jnp.zeros(plane, jnp.float32)
    tb_base = b * (num_gt * 4)
    for n in range(num_gt):
        gx = tb_ref[tb_base + 4 * n + 0]
        gy = tb_ref[tb_base + 4 * n + 1]
        gw = tb_ref[tb_base + 4 * n + 2]
        gh = tb_ref[tb_base + 4 * n + 3]
        g_x0 = gx - 0.5 * gw
        g_x1 = gx + 0.5 * gw
        g_y0 = gy - 0.5 * gh
        g_y1 = gy + 0.5 * gh
        giw = jnp.maximum(jnp.minimum(p_x1, g_x1) - jnp.maximum(p_x0, g_x0), 0.0)
        gih = jnp.maximum(jnp.minimum(p_y1, g_y1) - jnp.maximum(p_y0, g_y0), 0.0)
        g_inter = giw * gih
        # TODO(synk): like the PyTorch reference, no epsilon here -> 0/0 for
        # degenerate zero-area pred+GT pairs.
        g_iou = g_inter * _fast_recip(area_p + gw * gh - g_inter)
        max_iou = jnp.maximum(max_iou, g_iou)
    respond_bgd = (1.0 - respond) * valid * (max_iou < iou_thresh).astype(jnp.float32)
    sp_conf = _softplus(tconf)                       # == -log(1 - sigmoid(tconf))
    conf_loss = respond * (sp_conf - tconf) + respond_bgd * sp_conf

    # ---- accumulate per-batch sums across the M-tile axis ----
    part_ciou = jnp.sum(ciou_loss, keepdims=True)    # (1, 1)
    part_conf = jnp.sum(conf_loss, keepdims=True)
    part_prob = jnp.sum(prob_loss, keepdims=True)

    @pl.when(m == 0)
    def _():
        ciou_out[0] = part_ciou
        conf_out[0] = part_conf
        prob_out[0] = part_prob

    @pl.when(m > 0)
    def _():
        ciou_out[0] += part_ciou
        conf_out[0] += part_conf
        prob_out[0] += part_prob


# ---------------------------------------------------------------------------
# Wrapper (glue): layout transforms + pallas_call per scale
# ---------------------------------------------------------------------------
def _scale_losses_pallas(conv, label, bboxes, anchors, stride, num_class, iou_thresh):
    B, S = conv.shape[0], conv.shape[1]
    A, C = 3, num_class
    D = 5 + C
    M = S * S * A
    N = bboxes.shape[1]

    # pad M to a 128 multiple; tile it if large so per-step VMEM stays bounded
    m128 = ((M + _LANE - 1) // _LANE) * _LANE
    tile = m128 if m128 <= _MAX_TILE_LANES else _MAX_TILE_LANES
    Mpad = ((M + tile - 1) // tile) * tile
    MT = Mpad // tile
    TR = tile // _LANE
    pad = Mpad - M

    # one transpose per head: (B, M, D) -> (B, D, M) -> (B, D, Mpad/128, 128)
    conv_t = jnp.transpose(conv.reshape(B, M, D).astype(jnp.float32), (0, 2, 1))
    lab_t = jnp.transpose(label.reshape(B, M, D).astype(jnp.float32), (0, 2, 1))
    if pad:
        conv_t = jnp.pad(conv_t, ((0, 0), (0, 0), (0, pad)))
        lab_t = jnp.pad(lab_t, ((0, 0), (0, 0), (0, pad)))
    conv_t = conv_t.reshape(B, D, Mpad // _LANE, _LANE)
    lab_t = lab_t.reshape(B, D, Mpad // _LANE, _LANE)

    # offsets / anchors / valid-mask: rows = [off_x, off_y, anc_w, anc_h, valid]
    ar = jnp.arange(S, dtype=jnp.float32)
    off_x = jnp.broadcast_to(ar[None, :, None], (S, S, A)).reshape(-1)
    off_y = jnp.broadcast_to(ar[:, None, None], (S, S, A)).reshape(-1)
    anc = jnp.asarray(anchors, dtype=jnp.float32)          # (3, 2)
    anc_w = jnp.broadcast_to(anc[None, None, :, 0], (S, S, A)).reshape(-1)
    anc_h = jnp.broadcast_to(anc[None, None, :, 1], (S, S, A)).reshape(-1)
    valid = jnp.ones((M,), jnp.float32)
    oa = jnp.stack([off_x, off_y, anc_w, anc_h, valid], axis=0)   # (5, M)
    if pad:
        oa = jnp.pad(oa, ((0, 0), (0, pad)))
    oa = oa.reshape(5, Mpad // _LANE, _LANE)

    # GT boxes flattened into SMEM; read as scalars inside the kernel
    tb = bboxes.astype(jnp.float32).reshape(-1)                   # (B*N*4,)

    kern = functools.partial(
        _yolo_scale_kernel,
        stride=float(stride),
        inv_in2=1.0 / float(stride * S) ** 2,
        iou_thresh=float(iou_thresh),
        num_gt=N,
    )

    out_shape = tuple(jax.ShapeDtypeStruct((B, 1, 1), jnp.float32) for _ in range(3))
    out_specs = tuple(pl.BlockSpec((1, 1, 1), lambda b, m: (b, 0, 0)) for _ in range(3))

    ciou_b, conf_b, prob_b = pl.pallas_call(
        kern,
        out_shape=out_shape,
        grid=(B, MT),
        in_specs=[
            pl.BlockSpec((1, D, TR, _LANE), lambda b, m: (b, 0, m, 0)),
            pl.BlockSpec((1, D, TR, _LANE), lambda b, m: (b, 0, m, 0)),
            pl.BlockSpec((5, TR, _LANE), lambda b, m: (0, m, 0)),
            pl.BlockSpec(memory_space=pltpu.MemorySpace.SMEM),
        ],
        out_specs=out_specs,
        compiler_params=pltpu.CompilerParams(
            dimension_semantics=("parallel", "arbitrary")),
    )(conv_t, lab_t, oa, tb)

    # sums over all non-batch dims happened in-kernel; mean over batch is tiny glue
    return (jnp.mean(ciou_b[:, 0, 0]),
            jnp.mean(conf_b[:, 0, 0]),
            jnp.mean(prob_b[:, 0, 0]))


def yolo_loss_pallas(args, num_classes, iou_loss_thresh, anchors):
    (conv_lbbox, conv_mbbox, conv_sbbox,
     label_sbbox, label_mbbox, label_lbbox, true_bboxes) = args
    s = _scale_losses_pallas(conv_sbbox, label_sbbox, true_bboxes, anchors[0], 8,
                             num_classes, iou_loss_thresh)
    m = _scale_losses_pallas(conv_mbbox, label_mbbox, true_bboxes, anchors[1], 16,
                             num_classes, iou_loss_thresh)
    l = _scale_losses_pallas(conv_lbbox, label_lbbox, true_bboxes, anchors[2], 32,
                             num_classes, iou_loss_thresh)
    ciou_loss = s[0] + m[0] + l[0]
    conf_loss = s[1] + m[1] + l[1]
    prob_loss = s[2] + m[2] + l[2]
    all_loss = ciou_loss + conf_loss + prob_loss
    return [all_loss, ciou_loss, conf_loss, prob_loss]


# ---------------------------------------------------------------------------
# Pure-JAX reference (direct translation of the PyTorch code) for validation
# ---------------------------------------------------------------------------
def _decode_ref(conv, anchors, stride, num_class):
    B, S = conv.shape[0], conv.shape[1]
    A = len(anchors)
    conv = conv.reshape(B, S, S, A, 5 + num_class)
    dxdy, dwdh = conv[..., 0:2], conv[..., 2:4]
    dconf, dprob = conv[..., 4:5], conv[..., 5:]
    f = jnp.float32
    rows = jnp.tile(jnp.arange(S, dtype=f)[None, None, :, None, None], (1, S, 1, 1, 1))
    cols = jnp.tile(jnp.arange(S, dtype=f)[None, :, None, None, None], (1, 1, S, 1, 1))
    offset = jnp.concatenate([rows, cols], axis=-1)
    offset = jnp.tile(offset, (B, 1, 1, A, 1))
    pred_xy = (jax.nn.sigmoid(dxdy) + offset) * stride
    pred_wh = jnp.exp(dwdh) * jnp.asarray(anchors, dtype=f)
    return jnp.concatenate(
        [pred_xy, pred_wh, jax.nn.sigmoid(dconf), jax.nn.sigmoid(dprob)], axis=-1)


def _bbox_ciou_ref(b1, b2):
    b1c = jnp.concatenate([b1[..., :2] - b1[..., 2:] * 0.5,
                           b1[..., :2] + b1[..., 2:] * 0.5], axis=-1)
    b2c = jnp.concatenate([b2[..., :2] - b2[..., 2:] * 0.5,
                           b2[..., :2] + b2[..., 2:] * 0.5], axis=-1)
    b1c = jnp.concatenate([jnp.minimum(b1c[..., :2], b1c[..., 2:]),
                           jnp.maximum(b1c[..., :2], b1c[..., 2:])], axis=-1)
    b2c = jnp.concatenate([jnp.minimum(b2c[..., :2], b2c[..., 2:]),
                           jnp.maximum(b2c[..., :2], b2c[..., 2:])], axis=-1)
    a1 = (b1c[..., 2] - b1c[..., 0]) * (b1c[..., 3] - b1c[..., 1])
    a2 = (b2c[..., 2] - b2c[..., 0]) * (b2c[..., 3] - b2c[..., 1])
    lu = jnp.maximum(b1c[..., :2], b2c[..., :2])
    rd = jnp.minimum(b1c[..., 2:], b2c[..., 2:])
    inter = jnp.where(rd - lu < 0.0, 0.0, rd - lu)
    inter_area = inter[..., 0] * inter[..., 1]
    union = a1 + a2 - inter_area
    iou = inter_area / (union + 1e-9)
    elu = jnp.minimum(b1c[..., :2], b2c[..., :2])
    erd = jnp.maximum(b1c[..., 2:], b2c[..., 2:])
    ewh = erd - elu
    c2 = ewh[..., 0] ** 2 + ewh[..., 1] ** 2
    p2 = (b1[..., 0] - b2[..., 0]) ** 2 + (b1[..., 1] - b2[..., 1]) ** 2
    atan1 = jnp.arctan(b1[..., 2] / (b1[..., 3] + 1e-9))
    atan2 = jnp.arctan(b2[..., 2] / (b2[..., 3] + 1e-9))
    v = 4.0 * (atan1 - atan2) ** 2 / math.pi ** 2
    a = v / (1.0 - iou + v)
    return iou - p2 / c2 - a * v


def _bbox_iou_ref(b1, b2):
    a1 = b1[..., 2] * b1[..., 3]
    a2 = b2[..., 2] * b2[..., 3]
    b1 = jnp.concatenate([b1[..., :2] - b1[..., 2:] * 0.5,
                          b1[..., :2] + b1[..., 2:] * 0.5], axis=-1)
    b2 = jnp.concatenate([b2[..., :2] - b2[..., 2:] * 0.5,
                          b2[..., :2] + b2[..., 2:] * 0.5], axis=-1)
    lu = jnp.maximum(b1[..., :2], b2[..., :2])
    rd = jnp.minimum(b1[..., 2:], b2[..., 2:])
    inter = jnp.where(rd - lu < 0.0, 0.0, rd - lu)
    inter_area = inter[..., 0] * inter[..., 1]
    return inter_area / (a1 + a2 - inter_area)


def _loss_layer_ref(conv, pred, label, bboxes, stride, num_class, iou_thresh):
    S = conv.shape[1]
    input_size = float(stride * S)
    pred_xywh, pred_conf, pred_prob = pred[..., 0:4], pred[..., 4:5], pred[..., 5:]
    label_xywh, respond, label_prob = label[..., 0:4], label[..., 4:5], label[..., 5:]
    ciou = _bbox_ciou_ref(pred_xywh, label_xywh)[..., None]
    scale = 2.0 - label_xywh[..., 2:3] * label_xywh[..., 3:4] / input_size ** 2
    ciou_loss = respond * scale * (1.0 - ciou)
    pos = label_prob * (-jnp.log(pred_prob + 1e-9))
    neg = (1.0 - label_prob) * (-jnp.log(1.0 - pred_prob + 1e-9))
    prob_loss = respond * (pos + neg)
    iou = _bbox_iou_ref(pred_xywh[..., None, :], bboxes[:, None, None, None, :, :])
    max_iou = jnp.max(iou, axis=-1, keepdims=True)
    respond_bgd = (1.0 - respond) * (max_iou < iou_thresh).astype(jnp.float32)
    conf_loss = (respond * (-jnp.log(pred_conf + 1e-9))
                 + respond_bgd * (-jnp.log(1.0 - pred_conf + 1e-9)))
    return (jnp.mean(jnp.sum(ciou_loss, axis=(1, 2, 3, 4))),
            jnp.mean(jnp.sum(conf_loss, axis=(1, 2, 3, 4))),
            jnp.mean(jnp.sum(prob_loss, axis=(1, 2, 3, 4))))


def yolo_loss_ref(args, num_classes, iou_loss_thresh, anchors):
    (conv_lbbox, conv_mbbox, conv_sbbox,
     label_sbbox, label_mbbox, label_lbbox, true_bboxes) = args
    pred_s = _decode_ref(conv_sbbox, anchors[0], 8, num_classes)
    pred_m = _decode_ref(conv_mbbox, anchors[1], 16, num_classes)
    pred_l = _decode_ref(conv_lbbox, anchors[2], 32, num_classes)
    s = _loss_layer_ref(conv_sbbox, pred_s, label_sbbox, true_bboxes, 8, num_classes, iou_loss_thresh)
    m = _loss_layer_ref(conv_mbbox, pred_m, label_mbbox, true_bboxes, 16, num_classes, iou_loss_thresh)
    l = _loss_layer_ref(conv_lbbox, pred_l, label_lbbox, true_bboxes, 32, num_classes, iou_loss_thresh)
    ciou_loss = s[0] + m[0] + l[0]
    conf_loss = s[1] + m[1] + l[1]
    prob_loss = s[2] + m[2] + l[2]
    return [ciou_loss + conf_loss + prob_loss, ciou_loss, conf_loss, prob_loss]


# ---------------------------------------------------------------------------
# Demo
# ---------------------------------------------------------------------------
if __name__ == "__main__":
    key = jax.random.PRNGKey(0)
    B = 2           # batch
    C = 4           # num classes
    N = 8           # max ground-truth boxes per image
    IMG = 128
    IOU_THRESH = 0.5
    ANCHORS = [[[12., 16.], [19., 36.], [40., 28.]],
               [[36., 75.], [76., 55.], [72., 146.]],
               [[142., 110.], [192., 243.], [459., 401.]]]

    S_s, S_m, S_l = IMG // 8, IMG // 16, IMG // 32
    ks = jax.random.split(key, 8)

    def make_conv(k, S):
        return 0.5 * jax.random.normal(k, (B, S, S, 3 * (5 + C)), jnp.float32)

    def make_label(k, S):
        k1, k2, k3, k4 = jax.random.split(k, 4)
        xy = jax.random.uniform(k1, (B, S, S, 3, 2), jnp.float32, 0.0, float(IMG))
        wh = jax.random.uniform(k2, (B, S, S, 3, 2), jnp.float32, 4.0, 64.0)
        respond = (jax.random.uniform(k3, (B, S, S, 3, 1)) < 0.3).astype(jnp.float32)
        prob = (jax.random.uniform(k4, (B, S, S, 3, C)) < 0.25).astype(jnp.float32)
        return jnp.concatenate([xy, wh, respond, prob], axis=-1)

    conv_sbbox = make_conv(ks[0], S_s)
    conv_mbbox = make_conv(ks[1], S_m)
    conv_lbbox = make_conv(ks[2], S_l)
    label_sbbox = make_label(ks[3], S_s)
    label_mbbox = make_label(ks[4], S_m)
    label_lbbox = make_label(ks[5], S_l)
    tb_xy = jax.random.uniform(ks[6], (B, N, 2), jnp.float32, 0.0, float(IMG))
    tb_wh = jax.random.uniform(ks[7], (B, N, 2), jnp.float32, 4.0, 64.0)
    true_bboxes = jnp.concatenate([tb_xy, tb_wh], axis=-1)

    args = [conv_lbbox, conv_mbbox, conv_sbbox,
            label_sbbox, label_mbbox, label_lbbox, true_bboxes]

    out = yolo_loss_pallas(args, C, IOU_THRESH, ANCHORS)
    out = jax.block_until_ready(out)

    ref = jax.block_until_ready(yolo_loss_ref(args, C, IOU_THRESH, ANCHORS))
    for got, want in zip(out, ref):
        np.testing.assert_allclose(np.asarray(got), np.asarray(want),
                                   rtol=2e-3, atol=1e-2)

    print("KERNEL_OK")
</pallas_src>

<mosaic_0001>
module attributes {stable_mosaic.version = 11 : i64} {
  func.func @_yolo_scale_kernel(%arg0: i32, %arg1: i32, %arg2: memref<1x9x6x128xf32, #tpu.memory_space<vmem>>, %arg3: memref<1x9x6x128xf32, #tpu.memory_space<vmem>>, %arg4: memref<5x6x128xf32, #tpu.memory_space<vmem>>, %arg5: memref<64xf32, #tpu.memory_space<smem>>, %arg6: memref<1x1x1xf32, #tpu.memory_space<vmem>>, %arg7: memref<1x1x1xf32, #tpu.memory_space<vmem>>, %arg8: memref<1x1x1xf32, #tpu.memory_space<vmem>>) attributes {dimension_semantics = [#tpu.dimension_semantics<parallel>, #tpu.dimension_semantics<arbitrary>], iteration_bounds = array<i64: 2, 1>, scalar_prefetch = 0 : i64, scratch_operands = 0 : i64, tpu.core_type = #tpu.core_type<tc>, window_params = [{transform_indices = @transform_0, window_bounds = array<i64: 1, 9, 6, 128>}, {transform_indices = @transform_1, window_bounds = array<i64: 1, 9, 6, 128>}, {transform_indices = @transform_2, window_bounds = array<i64: 5, 6, 128>}, {transform_indices = @transform_3, window_bounds = array<i64: 64>}, {transform_indices = @transform_4, window_bounds = array<i64: 1, 1, 1>}, {transform_indices = @transform_5, window_bounds = array<i64: 1, 1, 1>}, {transform_indices = @transform_6, window_bounds = array<i64: 1, 1, 1>}]} {
    %c0 = arith.constant 0 : index
    %c0_0 = arith.constant 0 : index
    %c0_1 = arith.constant 0 : index
    %c0_2 = arith.constant 0 : index
    %0 = vector.load %arg2[%c0, %c0_0, %c0_1, %c0_2] : memref<1x9x6x128xf32, #tpu.memory_space<vmem>>, vector<1x1x6x128xf32>
    %1 = vector.shape_cast %0 : vector<1x1x6x128xf32> to vector<6x128xf32>
    %c0_3 = arith.constant 0 : index
    %c1 = arith.constant 1 : index
    %c0_4 = arith.constant 0 : index
    %c0_5 = arith.constant 0 : index
    %2 = vector.load %arg2[%c0_3, %c1, %c0_4, %c0_5] : memref<1x9x6x128xf32, #tpu.memory_space<vmem>>, vector<1x1x6x128xf32>
    %3 = vector.shape_cast %2 : vector<1x1x6x128xf32> to vector<6x128xf32>
    %c0_6 = arith.constant 0 : index
    %c2 = arith.constant 2 : index
    %c0_7 = arith.constant 0 : index
    %c0_8 = arith.constant 0 : index
    %4 = vector.load %arg2[%c0_6, %c2, %c0_7, %c0_8] : memref<1x9x6x128xf32, #tpu.memory_space<vmem>>, vector<1x1x6x128xf32>
    %5 = vector.shape_cast %4 : vector<1x1x6x128xf32> to vector<6x128xf32>
    %c0_9 = arith.constant 0 : index
    %c3 = arith.constant 3 : index
    %c0_10 = arith.constant 0 : index
    %c0_11 = arith.constant 0 : index
    %6 = vector.load %arg2[%c0_9, %c3, %c0_10, %c0_11] : memref<1x9x6x128xf32, #tpu.memory_space<vmem>>, vector<1x1x6x128xf32>
    %7 = vector.shape_cast %6 : vector<1x1x6x128xf32> to vector<6x128xf32>
    %c0_12 = arith.constant 0 : index
    %c4 = arith.constant 4 : index
    %c0_13 = arith.constant 0 : index
    %c0_14 = arith.constant 0 : index
    %8 = vector.load %arg2[%c0_12, %c4, %c0_13, %c0_14] : memref<1x9x6x128xf32, #tpu.memory_space<vmem>>, vector<1x1x6x128xf32>
    %9 = vector.shape_cast %8 : vector<1x1x6x128xf32> to vector<6x128xf32>
    %c0_15 = arith.constant 0 : index
    %c0_16 = arith.constant 0 : index
    %c0_17 = arith.constant 0 : index
    %c0_18 = arith.constant 0 : index
    %10 = vector.load %arg3[%c0_15, %c0_16, %c0_17, %c0_18] : memref<1x9x6x128xf32, #tpu.memory_space<vmem>>, vector<1x1x6x128xf32>
    %11 = vector.shape_cast %10 : vector<1x1x6x128xf32> to vector<6x128xf32>
    %c0_19 = arith.constant 0 : index
    %c1_20 = arith.constant 1 : index
    %c0_21 = arith.constant 0 : index
    %c0_22 = arith.constant 0 : index
    %12 = vector.load %arg3[%c0_19, %c1_20, %c0_21, %c0_22] : memref<1x9x6x128xf32, #tpu.memory_space<vmem>>, vector<1x1x6x128xf32>
    %13 = vector.shape_cast %12 : vector<1x1x6x128xf32> to vector<6x128xf32>
    %c0_23 = arith.constant 0 : index
    %c2_24 = arith.constant 2 : index
    %c0_25 = arith.constant 0 : index
    %c0_26 = arith.constant 0 : index
    %14 = vector.load %arg3[%c0_23, %c2_24, %c0_25, %c0_26] : memref<1x9x6x128xf32, #tpu.memory_space<vmem>>, vector<1x1x6x128xf32>
    %15 = vector.shape_cast %14 : vector<1x1x6x128xf32> to vector<6x128xf32>
    %c0_27 = arith.constant 0 : index
    %c3_28 = arith.constant 3 : index
    %c0_29 = arith.constant 0 : index
    %c0_30 = arith.constant 0 : index
    %16 = vector.load %arg3[%c0_27, %c3_28, %c0_29, %c0_30] : memref<1x9x6x128xf32, #tpu.memory_space<vmem>>, vector<1x1x6x128xf32>
    %17 = vector.shape_cast %16 : vector<1x1x6x128xf32> to vector<6x128xf32>
    %c0_31 = arith.constant 0 : index
    %c4_32 = arith.constant 4 : index
    %c0_33 = arith.constant 0 : index
    %c0_34 = arith.constant 0 : index
    %18 = vector.load %arg3[%c0_31, %c4_32, %c0_33, %c0_34] : memref<1x9x6x128xf32, #tpu.memory_space<vmem>>, vector<1x1x6x128xf32>
    %19 = vector.shape_cast %18 : vector<1x1x6x128xf32> to vector<6x128xf32>
    %c0_35 = arith.constant 0 : index
    %c0_36 = arith.constant 0 : index
    %c0_37 = arith.constant 0 : index
    %20 = vector.load %arg4[%c0_35, %c0_36, %c0_37] : memref<5x6x128xf32, #tpu.memory_space<vmem>>, vector<1x6x128xf32>
    %21 = vector.shape_cast %20 : vector<1x6x128xf32> to vector<6x128xf32>
    %c1_38 = arith.constant 1 : index
    %c0_39 = arith.constant 0 : index
    %c0_40 = arith.constant 0 : index
    %22 = vector.load %arg4[%c1_38, %c0_39, %c0_40] : memref<5x6x128xf32, #tpu.memory_space<vmem>>, vector<1x6x128xf32>
    %23 = vector.shape_cast %22 : vector<1x6x128xf32> to vector<6x128xf32>
    %c2_41 = arith.constant 2 : index
    %c0_42 = arith.constant 0 : index
    %c0_43 = arith.constant 0 : index
    %24 = vector.load %arg4[%c2_41, %c0_42, %c0_43] : memref<5x6x128xf32, #tpu.memory_space<vmem>>, vector<1x6x128xf32>
    %25 = vector.shape_cast %24 : vector<1x6x128xf32> to vector<6x128xf32>
    %c3_44 = arith.constant 3 : index
    %c0_45 = arith.constant 0 : index
    %c0_46 = arith.constant 0 : index
    %26 = vector.load %arg4[%c3_44, %c0_45, %c0_46] : memref<5x6x128xf32, #tpu.memory_space<vmem>>, vector<1x6x128xf32>
    %27 = vector.shape_cast %26 : vector<1x6x128xf32> to vector<6x128xf32>
    %c4_47 = arith.constant 4 : index
    %c0_48 = arith.constant 0 : index
    %c0_49 = arith.constant 0 : index
    %28 = vector.load %arg4[%c4_47, %c0_48, %c0_49] : memref<5x6x128xf32, #tpu.memory_space<vmem>>, vector<1x6x128xf32>
    %29 = vector.shape_cast %28 : vector<1x6x128xf32> to vector<6x128xf32>
    %cst = arith.constant 0.000000e+00 : f32
    %30 = vector.broadcast %cst : f32 to vector<6x128xf32>
    %31 = arith.subf %30, %1 : vector<6x128xf32>
    %32 = math.exp %31 : vector<6x128xf32>
    %cst_50 = arith.constant 1.000000e+00 : f32
    %33 = vector.broadcast %cst_50 : f32 to vector<6x128xf32>
    %34 = arith.addf %33, %32 : vector<6x128xf32>
    %35 = tpu.reciprocal %34 {approx = true} : vector<6x128xf32> -> vector<6x128xf32>
    %36 = arith.mulf %34, %35 : vector<6x128xf32>
    %cst_51 = arith.constant 2.000000e+00 : f32
    %37 = vector.broadcast %cst_51 : f32 to vector<6x128xf32>
    %38 = arith.subf %37, %36 : vector<6x128xf32>
    %39 = arith.mulf %35, %38 : vector<6x128xf32>
    %40 = arith.addf %39, %21 : vector<6x128xf32>
    %cst_52 = arith.constant 8.000000e+00 : f32
    %41 = vector.broadcast %cst_52 : f32 to vector<6x128xf32>
    %42 = arith.mulf %40, %41 : vector<6x128xf32>
    %cst_53 = arith.constant 0.000000e+00 : f32
    %43 = vector.broadcast %cst_53 : f32 to vector<6x128xf32>
    %44 = arith.subf %43, %3 : vector<6x128xf32>
    %45 = math.exp %44 : vector<6x128xf32>
    %cst_54 = arith.constant 1.000000e+00 : f32
    %46 = vector.broadcast %cst_54 : f32 to vector<6x128xf32>
    %47 = arith.addf %46, %45 : vector<6x128xf32>
    %48 = tpu.reciprocal %47 {approx = true} : vector<6x128xf32> -> vector<6x128xf32>
    %49 = arith.mulf %47, %48 : vector<6x128xf32>
    %cst_55 = arith.constant 2.000000e+00 : f32
    %50 = vector.broadcast %cst_55 : f32 to vector<6x128xf32>
    %51 = arith.subf %50, %49 : vector<6x128xf32>
    %52 = arith.mulf %48, %51 : vector<6x128xf32>
    %53 = arith.addf %52, %23 : vector<6x128xf32>
    %cst_56 = arith.constant 8.000000e+00 : f32
    %54 = vector.broadcast %cst_56 : f32 to vector<6x128xf32>
    %55 = arith.mulf %53, %54 : vector<6x128xf32>
    %56 = math.exp %5 : vector<6x128xf32>
    %57 = arith.mulf %56, %25 : vector<6x128xf32>
    %58 = math.exp %7 : vector<6x128xf32>
    %59 = arith.mulf %58, %27 : vector<6x128xf32>
    %cst_57 = arith.constant 5.000000e-01 : f32
    %60 = vector.broadcast %cst_57 : f32 to vector<6x128xf32>
    %61 = arith.mulf %60, %57 : vector<6x128xf32>
    %62 = arith.subf %42, %61 : vector<6x128xf32>
    %cst_58 = arith.constant 5.000000e-01 : f32
    %63 = vector.broadcast %cst_58 : f32 to vector<6x128xf32>
    %64 = arith.mulf %63, %57 : vector<6x128xf32>
    %65 = arith.addf %42, %64 : vector<6x128xf32>
    %cst_59 = arith.constant 5.000000e-01 : f32
    %66 = vector.broadcast %cst_59 : f32 to vector<6x128xf32>
    %67 = arith.mulf %66, %59 : vector<6x128xf32>
    %68 = arith.subf %55, %67 : vector<6x128xf32>
    %cst_60 = arith.constant 5.000000e-01 : f32
    %69 = vector.broadcast %cst_60 : f32 to vector<6x128xf32>
    %70 = arith.mulf %69, %59 : vector<6x128xf32>
    %71 = arith.addf %55, %70 : vector<6x128xf32>
    %cst_61 = arith.constant 5.000000e-01 : f32
    %72 = vector.broadcast %cst_61 : f32 to vector<6x128xf32>
    %73 = arith.mulf %72, %15 : vector<6x128xf32>
    %74 = arith.subf %11, %73 : vector<6x128xf32>
    %cst_62 = arith.constant 5.000000e-01 : f32
    %75 = vector.broadcast %cst_62 : f32 to vector<6x128xf32>
    %76 = arith.mulf %75, %15 : vector<6x128xf32>
    %77 = arith.addf %11, %76 : vector<6x128xf32>
    %cst_63 = arith.constant 5.000000e-01 : f32
    %78 = vector.broadcast %cst_63 : f32 to vector<6x128xf32>
    %79 = arith.mulf %78, %17 : vector<6x128xf32>
    %80 = arith.subf %13, %79 : vector<6x128xf32>
    %cst_64 = arith.constant 5.000000e-01 : f32
    %81 = vector.broadcast %cst_64 : f32 to vector<6x128xf32>
    %82 = arith.mulf %81, %17 : vector<6x128xf32>
    %83 = arith.addf %13, %82 : vector<6x128xf32>
    %84 = arith.minimumf %62, %65 : vector<6x128xf32>
    %85 = arith.maximumf %62, %65 : vector<6x128xf32>
    %86 = arith.minimumf %68, %71 : vector<6x128xf32>
    %87 = arith.maximumf %68, %71 : vector<6x128xf32>
    %88 = arith.minimumf %74, %77 : vector<6x128xf32>
    %89 = arith.maximumf %74, %77 : vector<6x128xf32>
    %90 = arith.minimumf %80, %83 : vector<6x128xf32>
    %91 = arith.maximumf %80, %83 : vector<6x128xf32>
    %92 = arith.subf %85, %84 : vector<6x128xf32>
    %93 = arith.subf %87, %86 : vector<6x128xf32>
    %94 = arith.mulf %92, %93 : vector<6x128xf32>
    %95 = arith.subf %89, %88 : vector<6x128xf32>
    %96 = arith.subf %91, %90 : vector<6x128xf32>
    %97 = arith.mulf %95, %96 : vector<6x128xf32>
    %98 = arith.minimumf %85, %89 : vector<6x128xf32>
    %99 = arith.maximumf %84, %88 : vector<6x128xf32>
    %100 = arith.subf %98, %99 : vector<6x128xf32>
    %cst_65 = arith.constant 0.000000e+00 : f32
    %101 = vector.broadcast %cst_65 : f32 to vector<6x128xf32>
    %102 = arith.maximumf %100, %101 : vector<6x128xf32>
    %103 = arith.minimumf %87, %91 : vector<6x128xf32>
    %104 = arith.maximumf %86, %90 : vector<6x128xf32>
    %105 = arith.subf %103, %104 : vector<6x128xf32>
    %cst_66 = arith.constant 0.000000e+00 : f32
    %106 = vector.broadcast %cst_66 : f32 to vector<6x128xf32>
    %107 = arith.maximumf %105, %106 : vector<6x128xf32>
    %108 = arith.mulf %102, %107 : vector<6x128xf32>
    %109 = arith.addf %94, %97 : vector<6x128xf32>
    %110 = arith.subf %109, %108 : vector<6x128xf32>
    %cst_67 = arith.constant 9.99999971E-10 : f32
    %111 = vector.broadcast %cst_67 : f32 to vector<6x128xf32>
    %112 = arith.addf %110, %111 : vector<6x128xf32>
    %113 = tpu.reciprocal %112 {approx = true} : vector<6x128xf32> -> vector<6x128xf32>
    %114 = arith.mulf %112, %113 : vector<6x128xf32>
    %cst_68 = arith.constant 2.000000e+00 : f32
    %115 = vector.broadcast %cst_68 : f32 to vector<6x128xf32>
    %116 = arith.subf %115, %114 : vector<6x128xf32>
    %117 = arith.mulf %113, %116 : vector<6x128xf32>
    %118 = arith.mulf %108, %117 : vector<6x128xf32>
    %119 = arith.maximumf %85, %89 : vector<6x128xf32>
    %120 = arith.minimumf %84, %88 : vector<6x128xf32>
    %121 = arith.subf %119, %120 : vector<6x128xf32>
    %122 = arith.maximumf %87, %91 : vector<6x128xf32>
    %123 = arith.minimumf %86, %90 : vector<6x128xf32>
    %124 = arith.subf %122, %123 : vector<6x128xf32>
    %125 = arith.mulf %121, %121 : vector<6x128xf32>
    %126 = arith.mulf %124, %124 : vector<6x128xf32>
    %127 = arith.addf %125, %126 : vector<6x128xf32>
    %128 = arith.subf %42, %11 : vector<6x128xf32>
    %129 = arith.subf %55, %13 : vector<6x128xf32>
    %130 = arith.mulf %128, %128 : vector<6x128xf32>
    %131 = arith.mulf %129, %129 : vector<6x128xf32>
    %132 = arith.addf %130, %131 : vector<6x128xf32>
    %cst_69 = arith.constant 9.99999971E-10 : f32
    %133 = vector.broadcast %cst_69 : f32 to vector<6x128xf32>
    %134 = arith.addf %59, %133 : vector<6x128xf32>
    %135 = tpu.reciprocal %134 {approx = true} : vector<6x128xf32> -> vector<6x128xf32>
    %136 = arith.mulf %134, %135 : vector<6x128xf32>
    %cst_70 = arith.constant 2.000000e+00 : f32
    %137 = vector.broadcast %cst_70 : f32 to vector<6x128xf32>
    %138 = arith.subf %137, %136 : vector<6x128xf32>
    %139 = arith.mulf %135, %138 : vector<6x128xf32>
    %140 = arith.mulf %57, %139 : vector<6x128xf32>
    %cst_71 = arith.constant 9.99999971E-10 : f32
    %141 = vector.broadcast %cst_71 : f32 to vector<6x128xf32>
    %142 = arith.addf %17, %141 : vector<6x128xf32>
    %143 = tpu.reciprocal %142 {approx = true} : vector<6x128xf32> -> vector<6x128xf32>
    %144 = arith.mulf %142, %143 : vector<6x128xf32>
    %cst_72 = arith.constant 2.000000e+00 : f32
    %145 = vector.broadcast %cst_72 : f32 to vector<6x128xf32>
    %146 = arith.subf %145, %144 : vector<6x128xf32>
    %147 = arith.mulf %143, %146 : vector<6x128xf32>
    %148 = arith.mulf %15, %147 : vector<6x128xf32>
    %149 = arith.subf %140, %148 : vector<6x128xf32>
    %150 = arith.mulf %140, %148 : vector<6x128xf32>
    %cst_73 = arith.constant 1.000000e+00 : f32
    %151 = vector.broadcast %cst_73 : f32 to vector<6x128xf32>
    %152 = arith.addf %151, %150 : vector<6x128xf32>
    %153 = tpu.reciprocal %152 {approx = true} : vector<6x128xf32> -> vector<6x128xf32>
    %154 = arith.mulf %152, %153 : vector<6x128xf32>
    %cst_74 = arith.constant 2.000000e+00 : f32
    %155 = vector.broadcast %cst_74 : f32 to vector<6x128xf32>
    %156 = arith.subf %155, %154 : vector<6x128xf32>
    %157 = arith.mulf %153, %156 : vector<6x128xf32>
    %158 = arith.mulf %149, %157 : vector<6x128xf32>
    %cst_75 = arith.constant 0.000000e+00 : f32
    %159 = vector.broadcast %cst_75 : f32 to vector<6x128xf32>
    %160 = arith.cmpf olt, %158, %159 : vector<6x128xf32>
    %cst_76 = arith.constant -1.000000e+00 : f32
    %cst_77 = arith.constant 1.000000e+00 : f32
    %161 = vector.broadcast %cst_76 : f32 to vector<6x128xf32>
    %162 = vector.broadcast %cst_77 : f32 to vector<6x128xf32>
    %163 = arith.select %160, %161, %162 : vector<6x128xi1>, vector<6x128xf32>
    %164 = math.absf %158 : vector<6x128xf32>
    %cst_78 = arith.constant 2.41421366 : f32
    %165 = vector.broadcast %cst_78 : f32 to vector<6x128xf32>
    %166 = arith.cmpf ogt, %164, %165 : vector<6x128xf32>
    %cst_79 = arith.constant 0.414213568 : f32
    %167 = vector.broadcast %cst_79 : f32 to vector<6x128xf32>
    %168 = arith.cmpf ogt, %164, %167 : vector<6x128xf32>
    %cst_80 = arith.constant dense<true> : vector<6x128xi1>
    %169 = arith.xori %166, %cst_80 : vector<6x128xi1>
    %170 = arith.andi %168, %169 : vector<6x128xi1>
    %cst_81 = arith.constant 0.785398185 : f32
    %cst_82 = arith.constant 0.000000e+00 : f32
    %171 = vector.broadcast %cst_81 : f32 to vector<6x128xf32>
    %172 = vector.broadcast %cst_82 : f32 to vector<6x128xf32>
    %173 = arith.select %170, %171, %172 : vector<6x128xi1>, vector<6x128xf32>
    %cst_83 = arith.constant 1.57079637 : f32
    %174 = vector.broadcast %cst_83 : f32 to vector<6x128xf32>
    %175 = arith.select %166, %174, %173 : vector<6x128xi1>, vector<6x128xf32>
    %cst_84 = arith.constant 1.000000e-30 : f32
    %176 = vector.broadcast %cst_84 : f32 to vector<6x128xf32>
    %177 = arith.maximumf %164, %176 : vector<6x128xf32>
    %178 = tpu.reciprocal %177 {approx = true} : vector<6x128xf32> -> vector<6x128xf32>
    %179 = arith.mulf %177, %178 : vector<6x128xf32>
    %cst_85 = arith.constant 2.000000e+00 : f32
    %180 = vector.broadcast %cst_85 : f32 to vector<6x128xf32>
    %181 = arith.subf %180, %179 : vector<6x128xf32>
    %182 = arith.mulf %178, %181 : vector<6x128xf32>
    %cst_86 = arith.constant 0.000000e+00 : f32
    %183 = vector.broadcast %cst_86 : f32 to vector<6x128xf32>
    %184 = arith.subf %183, %182 : vector<6x128xf32>
    %cst_87 = arith.constant 1.000000e+00 : f32
    %185 = vector.broadcast %cst_87 : f32 to vector<6x128xf32>
    %186 = arith.subf %164, %185 : vector<6x128xf32>
    %cst_88 = arith.constant 1.000000e+00 : f32
    %187 = vector.broadcast %cst_88 : f32 to vector<6x128xf32>
    %188 = arith.addf %164, %187 : vector<6x128xf32>
    %189 = tpu.reciprocal %188 {approx = true} : vector<6x128xf32> -> vector<6x128xf32>
    %190 = arith.mulf %188, %189 : vector<6x128xf32>
    %cst_89 = arith.constant 2.000000e+00 : f32
    %191 = vector.broadcast %cst_89 : f32 to vector<6x128xf32>
    %192 = arith.subf %191, %190 : vector<6x128xf32>
    %193 = arith.mulf %189, %192 : vector<6x128xf32>
    %194 = arith.mulf %186, %193 : vector<6x128xf32>
    %195 = arith.select %170, %194, %164 : vector<6x128xi1>, vector<6x128xf32>
    %196 = arith.select %166, %184, %195 : vector<6x128xi1>, vector<6x128xf32>
    %197 = arith.mulf %196, %196 : vector<6x128xf32>
    %cst_90 = arith.constant 0.0805374458 : f32
    %198 = vector.broadcast %cst_90 : f32 to vector<6x128xf32>
    %199 = arith.mulf %198, %197 : vector<6x128xf32>
    %cst_91 = arith.constant 0.138776854 : f32
    %200 = vector.broadcast %cst_91 : f32 to vector<6x128xf32>
    %201 = arith.subf %199, %200 : vector<6x128xf32>
    %202 = arith.mulf %201, %197 : vector<6x128xf32>
    %cst_92 = arith.constant 0.199777111 : f32
    %203 = vector.broadcast %cst_92 : f32 to vector<6x128xf32>
    %204 = arith.addf %202, %203 : vector<6x128xf32>
    %205 = arith.mulf %204, %197 : vector<6x128xf32>
    %cst_93 = arith.constant 0.333329499 : f32
    %206 = vector.broadcast %cst_93 : f32 to vector<6x128xf32>
    %207 = arith.subf %205, %206 : vector<6x128xf32>
    %208 = arith.mulf %207, %197 : vector<6x128xf32>
    %209 = arith.mulf %208, %196 : vector<6x128xf32>
    %210 = arith.addf %175, %209 : vector<6x128xf32>
    %211 = arith.addf %210, %196 : vector<6x128xf32>
    %212 = arith.mulf %163, %211 : vector<6x128xf32>
    %cst_94 = arith.constant 0.405284733 : f32
    %213 = vector.broadcast %cst_94 : f32 to vector<6x128xf32>
    %214 = arith.mulf %213, %212 : vector<6x128xf32>
    %215 = arith.mulf %214, %212 : vector<6x128xf32>
    %cst_95 = arith.constant 1.000000e+00 : f32
    %216 = vector.broadcast %cst_95 : f32 to vector<6x128xf32>
    %217 = arith.subf %216, %118 : vector<6x128xf32>
    %218 = arith.addf %217, %215 : vector<6x128xf32>
    %219 = tpu.reciprocal %218 {approx = true} : vector<6x128xf32> -> vector<6x128xf32>
    %220 = arith.mulf %218, %219 : vector<6x128xf32>
    %cst_96 = arith.constant 2.000000e+00 : f32
    %221 = vector.broadcast %cst_96 : f32 to vector<6x128xf32>
    %222 = arith.subf %221, %220 : vector<6x128xf32>
    %223 = arith.mulf %219, %222 : vector<6x128xf32>
    %224 = arith.mulf %215, %223 : vector<6x128xf32>
    %225 = tpu.reciprocal %127 {approx = true} : vector<6x128xf32> -> vector<6x128xf32>
    %226 = arith.mulf %127, %225 : vector<6x128xf32>
    %cst_97 = arith.constant 2.000000e+00 : f32
    %227 = vector.broadcast %cst_97 : f32 to vector<6x128xf32>
    %228 = arith.subf %227, %226 : vector<6x128xf32>
    %229 = arith.mulf %225, %228 : vector<6x128xf32>
    %230 = arith.mulf %132, %229 : vector<6x128xf32>
    %231 = arith.subf %118, %230 : vector<6x128xf32>
    %232 = arith.mulf %224, %215 : vector<6x128xf32>
    %233 = arith.subf %231, %232 : vector<6x128xf32>
    %234 = arith.mulf %15, %17 : vector<6x128xf32>
    %cst_98 = arith.constant 6.10351563E-5 : f32
    %235 = vector.broadcast %cst_98 : f32 to vector<6x128xf32>
    %236 = arith.mulf %234, %235 : vector<6x128xf32>
    %cst_99 = arith.constant 2.000000e+00 : f32
    %237 = vector.broadcast %cst_99 : f32 to vector<6x128xf32>
    %238 = arith.subf %237, %236 : vector<6x128xf32>
    %239 = arith.mulf %19, %238 : vector<6x128xf32>
    %cst_100 = arith.constant 1.000000e+00 : f32
    %240 = vector.broadcast %cst_100 : f32 to vector<6x128xf32>
    %241 = arith.subf %240, %233 : vector<6x128xf32>
    %242 = arith.mulf %239, %241 : vector<6x128xf32>
    %cst_101 = arith.constant 0.000000e+00 : f32
    %243 = vector.broadcast %cst_101 : f32 to vector<6x128xf32>
    %c0_102 = arith.constant 0 : index
    %c5 = arith.constant 5 : index
    %c0_103 = arith.constant 0 : index
    %c0_104 = arith.constant 0 : index
    %244 = vector.load %arg2[%c0_102, %c5, %c0_103, %c0_104] : memref<1x9x6x128xf32, #tpu.memory_space<vmem>>, vector<1x1x6x128xf32>
    %245 = vector.shape_cast %244 : vector<1x1x6x128xf32> to vector<6x128xf32>
    %c0_105 = arith.constant 0 : index
    %c5_106 = arith.constant 5 : index
    %c0_107 = arith.constant 0 : index
    %c0_108 = arith.constant 0 : index
    %246 = vector.load %arg3[%c0_105, %c5_106, %c0_107, %c0_108] : memref<1x9x6x128xf32, #tpu.memory_space<vmem>>, vector<1x1x6x128xf32>
    %247 = vector.shape_cast %246 : vector<1x1x6x128xf32> to vector<6x128xf32>
    %cst_109 = arith.constant 0.000000e+00 : f32
    %248 = vector.broadcast %cst_109 : f32 to vector<6x128xf32>
    %249 = arith.maximumf %245, %248 : vector<6x128xf32>
    %250 = math.absf %245 : vector<6x128xf32>
    %cst_110 = arith.constant 0.000000e+00 : f32
    %251 = vector.broadcast %cst_110 : f32 to vector<6x128xf32>
    %252 = arith.subf %251, %250 : vector<6x128xf32>
    %253 = math.exp %252 : vector<6x128xf32>
    %cst_111 = arith.constant 1.000000e+00 : f32
    %254 = vector.broadcast %cst_111 : f32 to vector<6x128xf32>
    %255 = arith.addf %254, %253 : vector<6x128xf32>
    %256 = math.log %255 : vector<6x128xf32>
    %257 = arith.addf %249, %256 : vector<6x128xf32>
    %258 = arith.mulf %247, %245 : vector<6x128xf32>
    %259 = arith.subf %257, %258 : vector<6x128xf32>
    %260 = arith.addf %243, %259 : vector<6x128xf32>
    %c0_112 = arith.constant 0 : index
    %c6 = arith.constant 6 : index
    %c0_113 = arith.constant 0 : index
    %c0_114 = arith.constant 0 : index
    %261 = vector.load %arg2[%c0_112, %c6, %c0_113, %c0_114] : memref<1x9x6x128xf32, #tpu.memory_space<vmem>>, vector<1x1x6x128xf32>
    %262 = vector.shape_cast %261 : vector<1x1x6x128xf32> to vector<6x128xf32>
    %c0_115 = arith.constant 0 : index
    %c6_116 = arith.constant 6 : index
    %c0_117 = arith.constant 0 : index
    %c0_118 = arith.constant 0 : index
    %263 = vector.load %arg3[%c0_115, %c6_116, %c0_117, %c0_118] : memref<1x9x6x128xf32, #tpu.memory_space<vmem>>, vector<1x1x6x128xf32>
    %264 = vector.shape_cast %263 : vector<1x1x6x128xf32> to vector<6x128xf32>
    %cst_119 = arith.constant 0.000000e+00 : f32
    %265 = vector.broadcast %cst_119 : f32 to vector<6x128xf32>
    %266 = arith.maximumf %262, %265 : vector<6x128xf32>
    %267 = math.absf %262 : vector<6x128xf32>
    %cst_120 = arith.constant 0.000000e+00 : f32
    %268 = vector.broadcast %cst_120 : f32 to vector<6x128xf32>
    %269 = arith.subf %268, %267 : vector<6x128xf32>
    %270 = math.exp %269 : vector<6x128xf32>
    %cst_121 = arith.constant 1.000000e+00 : f32
    %271 = vector.broadcast %cst_121 : f32 to vector<6x128xf32>
    %272 = arith.addf %271, %270 : vector<6x128xf32>
    %273 = math.log %272 : vector<6x128xf32>
    %274 = arith.addf %266, %273 : vector<6x128xf32>
    %275 = arith.mulf %264, %262 : vector<6x128xf32>
    %276 = arith.subf %274, %275 : vector<6x128xf32>
    %277 = arith.addf %260, %276 : vector<6x128xf32>
    %c0_122 = arith.constant 0 : index
    %c7 = arith.constant 7 : index
    %c0_123 = arith.constant 0 : index
    %c0_124 = arith.constant 0 : index
    %278 = vector.load %arg2[%c0_122, %c7, %c0_123, %c0_124] : memref<1x9x6x128xf32, #tpu.memory_space<vmem>>, vector<1x1x6x128xf32>
    %279 = vector.shape_cast %278 : vector<1x1x6x128xf32> to vector<6x128xf32>
    %c0_125 = arith.constant 0 : index
    %c7_126 = arith.constant 7 : index
    %c0_127 = arith.constant 0 : index
    %c0_128 = arith.constant 0 : index
    %280 = vector.load %arg3[%c0_125, %c7_126, %c0_127, %c0_128] : memref<1x9x6x128xf32, #tpu.memory_space<vmem>>, vector<1x1x6x128xf32>
    %281 = vector.shape_cast %280 : vector<1x1x6x128xf32> to vector<6x128xf32>
    %cst_129 = arith.constant 0.000000e+00 : f32
    %282 = vector.broadcast %cst_129 : f32 to vector<6x128xf32>
    %283 = arith.maximumf %279, %282 : vector<6x128xf32>
    %284 = math.absf %279 : vector<6x128xf32>
    %cst_130 = arith.constant 0.000000e+00 : f32
    %285 = vector.broadcast %cst_130 : f32 to vector<6x128xf32>
    %286 = arith.subf %285, %284 : vector<6x128xf32>
    %287 = math.exp %286 : vector<6x128xf32>
    %cst_131 = arith.constant 1.000000e+00 : f32
    %288 = vector.broadcast %cst_131 : f32 to vector<6x128xf32>
    %289 = arith.addf %288, %287 : vector<6x128xf32>
    %290 = math.log %289 : vector<6x128xf32>
    %291 = arith.addf %283, %290 : vector<6x128xf32>
    %292 = arith.mulf %281, %279 : vector<6x128xf32>
    %293 = arith.subf %291, %292 : vector<6x128xf32>
    %294 = arith.addf %277, %293 : vector<6x128xf32>
    %c0_132 = arith.constant 0 : index
    %c8 = arith.constant 8 : index
    %c0_133 = arith.constant 0 : index
    %c0_134 = arith.constant 0 : index
    %295 = vector.load %arg2[%c0_132, %c8, %c0_133, %c0_134] : memref<1x9x6x128xf32, #tpu.memory_space<vmem>>, vector<1x1x6x128xf32>
    %296 = vector.shape_cast %295 : vector<1x1x6x128xf32> to vector<6x128xf32>
    %c0_135 = arith.constant 0 : index
    %c8_136 = arith.constant 8 : index
    %c0_137 = arith.constant 0 : index
    %c0_138 = arith.constant 0 : index
    %297 = vector.load %arg3[%c0_135, %c8_136, %c0_137, %c0_138] : memref<1x9x6x128xf32, #tpu.memory_space<vmem>>, vector<1x1x6x128xf32>
    %298 = vector.shape_cast %297 : vector<1x1x6x128xf32> to vector<6x128xf32>
    %cst_139 = arith.constant 0.000000e+00 : f32
    %299 = vector.broadcast %cst_139 : f32 to vector<6x128xf32>
    %300 = arith.maximumf %296, %299 : vector<6x128xf32>
    %301 = math.absf %296 : vector<6x128xf32>
    %cst_140 = arith.constant 0.000000e+00 : f32
    %302 = vector.broadcast %cst_140 : f32 to vector<6x128xf32>
    %303 = arith.subf %302, %301 : vector<6x128xf32>
    %304 = math.exp %303 : vector<6x128xf32>
    %cst_141 = arith.constant 1.000000e+00 : f32
    %305 = vector.broadcast %cst_141 : f32 to vector<6x128xf32>
    %306 = arith.addf %305, %304 : vector<6x128xf32>
    %307 = math.log %306 : vector<6x128xf32>
    %308 = arith.addf %300, %307 : vector<6x128xf32>
    %309 = arith.mulf %298, %296 : vector<6x128xf32>
    %310 = arith.subf %308, %309 : vector<6x128xf32>
    %311 = arith.addf %294, %310 : vector<6x128xf32>
    %312 = arith.mulf %19, %311 : vector<6x128xf32>
    %313 = arith.mulf %57, %59 : vector<6x128xf32>
    %cst_142 = arith.constant 0.000000e+00 : f32
    %314 = vector.broadcast %cst_142 : f32 to vector<6x128xf32>
    %c32_i32 = arith.constant 32 : i32
    %315 = arith.muli %arg0, %c32_i32 : i32
    %c0_i32 = arith.constant 0 : i32
    %316 = arith.addi %315, %c0_i32 : i32
    %c0_i32_143 = arith.constant 0 : i32
    %317 = arith.addi %316, %c0_i32_143 : i32
    %318 = arith.index_cast %317 : i32 to index
    %319 = memref.load %arg5[%318] : memref<64xf32, #tpu.memory_space<smem>>
    %c0_i32_144 = arith.constant 0 : i32
    %320 = arith.addi %315, %c0_i32_144 : i32
    %c1_i32 = arith.constant 1 : i32
    %321 = arith.addi %320, %c1_i32 : i32
    %322 = arith.index_cast %321 : i32 to index
    %323 = memref.load %arg5[%322] : memref<64xf32, #tpu.memory_space<smem>>
    %c0_i32_145 = arith.constant 0 : i32
    %324 = arith.addi %315, %c0_i32_145 : i32
    %c2_i32 = arith.constant 2 : i32
    %325 = arith.addi %324, %c2_i32 : i32
    %326 = arith.index_cast %325 : i32 to index
    %327 = memref.load %arg5[%326] : memref<64xf32, #tpu.memory_space<smem>>
    %c0_i32_146 = arith.constant 0 : i32
    %328 = arith.addi %315, %c0_i32_146 : i32
    %c3_i32 = arith.constant 3 : i32
    %329 = arith.addi %328, %c3_i32 : i32
    %330 = arith.index_cast %329 : i32 to index
    %331 = memref.load %arg5[%330] : memref<64xf32, #tpu.memory_space<smem>>
    %cst_147 = arith.constant 5.000000e-01 : f32
    %332 = arith.mulf %cst_147, %327 : f32
    %333 = arith.subf %319, %332 : f32
    %cst_148 = arith.constant 5.000000e-01 : f32
    %334 = arith.mulf %cst_148, %327 : f32
    %335 = arith.addf %319, %334 : f32
    %cst_149 = arith.constant 5.000000e-01 : f32
    %336 = arith.mulf %cst_149, %331 : f32
    %337 = arith.subf %323, %336 : f32
    %cst_150 = arith.constant 5.000000e-01 : f32
    %338 = arith.mulf %cst_150, %331 : f32
    %339 = arith.addf %323, %338 : f32
    %340 = vector.broadcast %335 : f32 to vector<6x128xf32>
    %341 = arith.minimumf %65, %340 : vector<6x128xf32>
    %342 = vector.broadcast %333 : f32 to vector<6x128xf32>
    %343 = arith.maximumf %62, %342 : vector<6x128xf32>
    %344 = arith.subf %341, %343 : vector<6x128xf32>
    %cst_151 = arith.constant 0.000000e+00 : f32
    %345 = vector.broadcast %cst_151 : f32 to vector<6x128xf32>
    %346 = arith.maximumf %344, %345 : vector<6x128xf32>
    %347 = vector.broadcast %339 : f32 to vector<6x128xf32>
    %348 = arith.minimumf %71, %347 : vector<6x128xf32>
    %349 = vector.broadcast %337 : f32 to vector<6x128xf32>
    %350 = arith.maximumf %68, %349 : vector<6x128xf32>
    %351 = arith.subf %348, %350 : vector<6x128xf32>
    %cst_152 = arith.constant 0.000000e+00 : f32
    %352 = vector.broadcast %cst_152 : f32 to vector<6x128xf32>
    %353 = arith.maximumf %351, %352 : vector<6x128xf32>
    %354 = arith.mulf %346, %353 : vector<6x128xf32>
    %355 = arith.mulf %327, %331 : f32
    %356 = vector.broadcast %355 : f32 to vector<6x128xf32>
    %357 = arith.addf %313, %356 : vector<6x128xf32>
    %358 = arith.subf %357, %354 : vector<6x128xf32>
    %359 = tpu.reciprocal %358 {approx = true} : vector<6x128xf32> -> vector<6x128xf32>
    %360 = arith.mulf %358, %359 : vector<6x128xf32>
    %cst_153 = arith.constant 2.000000e+00 : f32
    %361 = vector.broadcast %cst_153 : f32 to vector<6x128xf32>
    %362 = arith.subf %361, %360 : vector<6x128xf32>
    %363 = arith.mulf %359, %362 : vector<6x128xf32>
    %364 = arith.mulf %354, %363 : vector<6x128xf32>
    %365 = arith.maximumf %314, %364 : vector<6x128xf32>
    %c4_i32 = arith.constant 4 : i32
    %366 = arith.addi %315, %c4_i32 : i32
    %c0_i32_154 = arith.constant 0 : i32
    %367 = arith.addi %366, %c0_i32_154 : i32
    %368 = arith.index_cast %367 : i32 to index
    %369 = memref.load %arg5[%368] : memref<64xf32, #tpu.memory_space<smem>>
    %c4_i32_155 = arith.constant 4 : i32
    %370 = arith.addi %315, %c4_i32_155 : i32
    %c1_i32_156 = arith.constant 1 : i32
    %371 = arith.addi %370, %c1_i32_156 : i32
    %372 = arith.index_cast %371 : i32 to index
    %373 = memref.load %arg5[%372] : memref<64xf32, #tpu.memory_space<smem>>
    %c4_i32_157 = arith.constant 4 : i32
    %374 = arith.addi %315, %c4_i32_157 : i32
    %c2_i32_158 = arith.constant 2 : i32
    %375 = arith.addi %374, %c2_i32_158 : i32
    %376 = arith.index_cast %375 : i32 to index
    %377 = memref.load %arg5[%376] : memref<64xf32, #tpu.memory_space<smem>>
    %c4_i32_159 = arith.constant 4 : i32
    %378 = arith.addi %315, %c4_i32_159 : i32
    %c3_i32_160 = arith.constant 3 : i32
    %379 = arith.addi %378, %c3_i32_160 : i32
    %380 = arith.index_cast %379 : i32 to index
    %381 = memref.load %arg5[%380] : memref<64xf32, #tpu.memory_space<smem>>
    %cst_161 = arith.constant 5.000000e-01 : f32
    %382 = arith.mulf %cst_161, %377 : f32
    %383 = arith.subf %369, %382 : f32
    %cst_162 = arith.constant 5.000000e-01 : f32
    %384 = arith.mulf %cst_162, %377 : f32
    %385 = arith.addf %369, %384 : f32
    %cst_163 = arith.constant 5.000000e-01 : f32
    %386 = arith.mulf %cst_163, %381 : f32
    %387 = arith.subf %373, %386 : f32
    %cst_164 = arith.constant 5.000000e-01 : f32
    %388 = arith.mulf %cst_164, %381 : f32
    %389 = arith.addf %373, %388 : f32
    %390 = vector.broadcast %385 : f32 to vector<6x128xf32>
    %391 = arith.minimumf %65, %390 : vector<6x128xf32>
    %392 = vector.broadcast %383 : f32 to vector<6x128xf32>
    %393 = arith.maximumf %62, %392 : vector<6x128xf32>
    %394 = arith.subf %391, %393 : vector<6x128xf32>
    %cst_165 = arith.constant 0.000000e+00 : f32
    %395 = vector.broadcast %cst_165 : f32 to vector<6x128xf32>
    %396 = arith.maximumf %394, %395 : vector<6x128xf32>
    %397 = vector.broadcast %389 : f32 to vector<6x128xf32>
    %398 = arith.minimumf %71, %397 : vector<6x128xf32>
    %399 = vector.broadcast %387 : f32 to vector<6x128xf32>
    %400 = arith.maximumf %68, %399 : vector<6x128xf32>
    %401 = arith.subf %398, %400 : vector<6x128xf32>
    %cst_166 = arith.constant 0.000000e+00 : f32
    %402 = vector.broadcast %cst_166 : f32 to vector<6x128xf32>
    %403 = arith.maximumf %401, %402 : vector<6x128xf32>
    %404 = arith.mulf %396, %403 : vector<6x128xf32>
    %405 = arith.mulf %377, %381 : f32
    %406 = vector.broadcast %405 : f32 to vector<6x128xf32>
    %407 = arith.addf %313, %406 : vector<6x128xf32>
    %408 = arith.subf %407, %404 : vector<6x128xf32>
    %409 = tpu.reciprocal %408 {approx = true} : vector<6x128xf32> -> vector<6x128xf32>
    %410 = arith.mulf %408, %409 : vector<6x128xf32>
    %cst_167 = arith.constant 2.000000e+00 : f32
    %411 = vector.broadcast %cst_167 : f32 to vector<6x128xf32>
    %412 = arith.subf %411, %410 : vector<6x128xf32>
    %413 = arith.mulf %409, %412 : vector<6x128xf32>
    %414 = arith.mulf %404, %413 : vector<6x128xf32>
    %415 = arith.maximumf %365, %414 : vector<6x128xf32>
    %c8_i32 = arith.constant 8 : i32
    %416 = arith.addi %315, %c8_i32 : i32
    %c0_i32_168 = arith.constant 0 : i32
    %417 = arith.addi %416, %c0_i32_168 : i32
    %418 = arith.index_cast %417 : i32 to index
    %419 = memref.load %arg5[%418] : memref<64xf32, #tpu.memory_space<smem>>
    %c8_i32_169 = arith.constant 8 : i32
    %420 = arith.addi %315, %c8_i32_169 : i32
    %c1_i32_170 = arith.constant 1 : i32
    %421 = arith.addi %420, %c1_i32_170 : i32
    %422 = arith.index_cast %421 : i32 to index
    %423 = memref.load %arg5[%422] : memref<64xf32, #tpu.memory_space<smem>>
    %c8_i32_171 = arith.constant 8 : i32
    %424 = arith.addi %315, %c8_i32_171 : i32
    %c2_i32_172 = arith.constant 2 : i32
    %425 = arith.addi %424, %c2_i32_172 : i32
    %426 = arith.index_cast %425 : i32 to index
    %427 = memref.load %arg5[%426] : memref<64xf32, #tpu.memory_space<smem>>
    %c8_i32_173 = arith.constant 8 : i32
    %428 = arith.addi %315, %c8_i32_173 : i32
    %c3_i32_174 = arith.constant 3 : i32
    %429 = arith.addi %428, %c3_i32_174 : i32
    %430 = arith.index_cast %429 : i32 to index
    %431 = memref.load %arg5[%430] : memref<64xf32, #tpu.memory_space<smem>>
    %cst_175 = arith.constant 5.000000e-01 : f32
    %432 = arith.mulf %cst_175, %427 : f32
    %433 = arith.subf %419, %432 : f32
    %cst_176 = arith.constant 5.000000e-01 : f32
    %434 = arith.mulf %cst_176, %427 : f32
    %435 = arith.addf %419, %434 : f32
    %cst_177 = arith.constant 5.000000e-01 : f32
    %436 = arith.mulf %cst_177, %431 : f32
    %437 = arith.subf %423, %436 : f32
    %cst_178 = arith.constant 5.000000e-01 : f32
    %438 = arith.mulf %cst_178, %431 : f32
    %439 = arith.addf %423, %438 : f32
    %440 = vector.broadcast %435 : f32 to vector<6x128xf32>
    %441 = arith.minimumf %65, %440 : vector<6x128xf32>
    %442 = vector.broadcast %433 : f32 to vector<6x128xf32>
    %443 = arith.maximumf %62, %442 : vector<6x128xf32>
    %444 = arith.subf %441, %443 : vector<6x128xf32>
    %cst_179 = arith.constant 0.000000e+00 : f32
    %445 = vector.broadcast %cst_179 : f32 to vector<6x128xf32>
    %446 = arith.maximumf %444, %445 : vector<6x128xf32>
    %447 = vector.broadcast %439 : f32 to vector<6x128xf32>
    %448 = arith.minimumf %71, %447 : vector<6x128xf32>
    %449 = vector.broadcast %437 : f32 to vector<6x128xf32>
    %450 = arith.maximumf %68, %449 : vector<6x128xf32>
    %451 = arith.subf %448, %450 : vector<6x128xf32>
    %cst_180 = arith.constant 0.000000e+00 : f32
    %452 = vector.broadcast %cst_180 : f32 to vector<6x128xf32>
    %453 = arith.maximumf %451, %452 : vector<6x128xf32>
    %454 = arith.mulf %446, %453 : vector<6x128xf32>
    %455 = arith.mulf %427, %431 : f32
    %456 = vector.broadcast %455 : f32 to vector<6x128xf32>
    %457 = arith.addf %313, %456 : vector<6x128xf32>
    %458 = arith.subf %457, %454 : vector<6x128xf32>
    %459 = tpu.reciprocal %458 {approx = true} : vector<6x128xf32> -> vector<6x128xf32>
    %460 = arith.mulf %458, %459 : vector<6x128xf32>
    %cst_181 = arith.constant 2.000000e+00 : f32
    %461 = vector.broadcast %cst_181 : f32 to vector<6x128xf32>
    %462 = arith.subf %461, %460 : vector<6x128xf32>
    %463 = arith.mulf %459, %462 : vector<6x128xf32>
    %464 = arith.mulf %454, %463 : vector<6x128xf32>
    %465 = arith.maximumf %415, %464 : vector<6x128xf32>
    %c12_i32 = arith.constant 12 : i32
    %466 = arith.addi %315, %c12_i32 : i32
    %c0_i32_182 = arith.constant 0 : i32
    %467 = arith.addi %466, %c0_i32_182 : i32
    %468 = arith.index_cast %467 : i32 to index
    %469 = memref.load %arg5[%468] : memref<64xf32, #tpu.memory_space<smem>>
    %c12_i32_183 = arith.constant 12 : i32
    %470 = arith.addi %315, %c12_i32_183 : i32
    %c1_i32_184 = arith.constant 1 : i32
    %471 = arith.addi %470, %c1_i32_184 : i32
    %472 = arith.index_cast %471 : i32 to index
    %473 = memref.load %arg5[%472] : memref<64xf32, #tpu.memory_space<smem>>
    %c12_i32_185 = arith.constant 12 : i32
    %474 = arith.addi %315, %c12_i32_185 : i32
    %c2_i32_186 = arith.constant 2 : i32
    %475 = arith.addi %474, %c2_i32_186 : i32
    %476 = arith.index_cast %475 : i32 to index
    %477 = memref.load %arg5[%476] : memref<64xf32, #tpu.memory_space<smem>>
    %c12_i32_187 = arith.constant 12 : i32
    %478 = arith.addi %315, %c12_i32_187 : i32
    %c3_i32_188 = arith.constant 3 : i32
    %479 = arith.addi %478, %c3_i32_188 : i32
    %480 = arith.index_cast %479 : i32 to index
    %481 = memref.load %arg5[%480] : memref<64xf32, #tpu.memory_space<smem>>
    %cst_189 = arith.constant 5.000000e-01 : f32
    %482 = arith.mulf %cst_189, %477 : f32
    %483 = arith.subf %469, %482 : f32
    %cst_190 = arith.constant 5.000000e-01 : f32
    %484 = arith.mulf %cst_190, %477 : f32
    %485 = arith.addf %469, %484 : f32
    %cst_191 = arith.constant 5.000000e-01 : f32
    %486 = arith.mulf %cst_191, %481 : f32
    %487 = arith.subf %473, %486 : f32
    %cst_192 = arith.constant 5.000000e-01 : f32
    %488 = arith.mulf %cst_192, %481 : f32
    %489 = arith.addf %473, %488 : f32
    %490 = vector.broadcast %485 : f32 to vector<6x128xf32>
    %491 = arith.minimumf %65, %490 : vector<6x128xf32>
    %492 = vector.broadcast %483 : f32 to vector<6x128xf32>
    %493 = arith.maximumf %62, %492 : vector<6x128xf32>
    %494 = arith.subf %491, %493 : vector<6x128xf32>
    %cst_193 = arith.constant 0.000000e+00 : f32
    %495 = vector.broadcast %cst_193 : f32 to vector<6x128xf32>
    %496 = arith.maximumf %494, %495 : vector<6x128xf32>
    %497 = vector.broadcast %489 : f32 to vector<6x128xf32>
    %498 = arith.minimumf %71, %497 : vector<6x128xf32>
    %499 = vector.broadcast %487 : f32 to vector<6x128xf32>
    %500 = arith.maximumf %68, %499 : vector<6x128xf32>
    %501 = arith.subf %498, %500 : vector<6x128xf32>
    %cst_194 = arith.constant 0.000000e+00 : f32
    %502 = vector.broadcast %cst_194 : f32 to vector<6x128xf32>
    %503 = arith.maximumf %501, %502 : vector<6x128xf32>
    %504 = arith.mulf %496, %503 : vector<6x128xf32>
    %505 = arith.mulf %477, %481 : f32
    %506 = vector.broadcast %505 : f32 to vector<6x128xf32>
    %507 = arith.addf %313, %506 : vector<6x128xf32>
    %508 = arith.subf %507, %504 : vector<6x128xf32>
    %509 = tpu.reciprocal %508 {approx = true} : vector<6x128xf32> -> vector<6x128xf32>
    %510 = arith.mulf %508, %509 : vector<6x128xf32>
    %cst_195 = arith.constant 2.000000e+00 : f32
    %511 = vector.broadcast %cst_195 : f32 to vector<6x128xf32>
    %512 = arith.subf %511, %510 : vector<6x128xf32>
    %513 = arith.mulf %509, %512 : vector<6x128xf32>
    %514 = arith.mulf %504, %513 : vector<6x128xf32>
    %515 = arith.maximumf %465, %514 : vector<6x128xf32>
    %c16_i32 = arith.constant 16 : i32
    %516 = arith.addi %315, %c16_i32 : i32
    %c0_i32_196 = arith.constant 0 : i32
    %517 = arith.addi %516, %c0_i32_196 : i32
    %518 = arith.index_cast %517 : i32 to index
    %519 = memref.load %arg5[%518] : memref<64xf32, #tpu.memory_space<smem>>
    %c16_i32_197 = arith.constant 16 : i32
    %520 = arith.addi %315, %c16_i32_197 : i32
    %c1_i32_198 = arith.constant 1 : i32
    %521 = arith.addi %520, %c1_i32_198 : i32
    %522 = arith.index_cast %521 : i32 to index
    %523 = memref.load %arg5[%522] : memref<64xf32, #tpu.memory_space<smem>>
    %c16_i32_199 = arith.constant 16 : i32
    %524 = arith.addi %315, %c16_i32_199 : i32
    %c2_i32_200 = arith.constant 2 : i32
    %525 = arith.addi %524, %c2_i32_200 : i32
    %526 = arith.index_cast %525 : i32 to index
    %527 = memref.load %arg5[%526] : memref<64xf32, #tpu.memory_space<smem>>
    %c16_i32_201 = arith.constant 16 : i32
    %528 = arith.addi %315, %c16_i32_201 : i32
    %c3_i32_202 = arith.constant 3 : i32
    %529 = arith.addi %528, %c3_i32_202 : i32
    %530 = arith.index_cast %529 : i32 to index
    %531 = memref.load %arg5[%530] : memref<64xf32, #tpu.memory_space<smem>>
    %cst_203 = arith.constant 5.000000e-01 : f32
    %532 = arith.mulf %cst_203, %527 : f32
    %533 = arith.subf %519, %532 : f32
    %cst_204 = arith.constant 5.000000e-01 : f32
    %534 = arith.mulf %cst_204, %527 : f32
    %535 = arith.addf %519, %534 : f32
    %cst_205 = arith.constant 5.000000e-01 : f32
    %536 = arith.mulf %cst_205, %531 : f32
    %537 = arith.subf %523, %536 : f32
    %cst_206 = arith.constant 5.000000e-01 : f32
    %538 = arith.mulf %cst_206, %531 : f32
    %539 = arith.addf %523, %538 : f32
    %540 = vector.broadcast %535 : f32 to vector<6x128xf32>
    %541 = arith.minimumf %65, %540 : vector<6x128xf32>
    %542 = vector.broadcast %533 : f32 to vector<6x128xf32>
    %543 = arith.maximumf %62, %542 : vector<6x128xf32>
    %544 = arith.subf %541, %543 : vector<6x128xf32>
    %cst_207 = arith.constant 0.000000e+00 : f32
    %545 = vector.broadcast %cst_207 : f32 to vector<6x128xf32>
    %546 = arith.maximumf %544, %545 : vector<6x128xf32>
    %547 = vector.broadcast %539 : f32 to vector<6x128xf32>
    %548 = arith.minimumf %71, %547 : vector<6x128xf32>
    %549 = vector.broadcast %537 : f32 to vector<6x128xf32>
    %550 = arith.maximumf %68, %549 : vector<6x128xf32>
    %551 = arith.subf %548, %550 : vector<6x128xf32>
    %cst_208 = arith.constant 0.000000e+00 : f32
    %552 = vector.broadcast %cst_208 : f32 to vector<6x128xf32>
    %553 = arith.maximumf %551, %552 : vector<6x128xf32>
    %554 = arith.mulf %546, %553 : vector<6x128xf32>
    %555 = arith.mulf %527, %531 : f32
    %556 = vector.broadcast %555 : f32 to vector<6x128xf32>
    %557 = arith.addf %313, %556 : vector<6x128xf32>
    %558 = arith.subf %557, %554 : vector<6x128xf32>
    %559 = tpu.reciprocal %558 {approx = true} : vector<6x128xf32> -> vector<6x128xf32>
    %560 = arith.mulf %558, %559 : vector<6x128xf32>
    %cst_209 = arith.constant 2.000000e+00 : f32
    %561 = vector.broadcast %cst_209 : f32 to vector<6x128xf32>
    %562 = arith.subf %561, %560 : vector<6x128xf32>
    %563 = arith.mulf %559, %562 : vector<6x128xf32>
    %564 = arith.mulf %554, %563 : vector<6x128xf32>
    %565 = arith.maximumf %515, %564 : vector<6x128xf32>
    %c20_i32 = arith.constant 20 : i32
    %566 = arith.addi %315, %c20_i32 : i32
    %c0_i32_210 = arith.constant 0 : i32
    %567 = arith.addi %566, %c0_i32_210 : i32
    %568 = arith.index_cast %567 : i32 to index
    %569 = memref.load %arg5[%568] : memref<64xf32, #tpu.memory_space<smem>>
    %c20_i32_211 = arith.constant 20 : i32
    %570 = arith.addi %315, %c20_i32_211 : i32
    %c1_i32_212 = arith.constant 1 : i32
    %571 = arith.addi %570, %c1_i32_212 : i32
    %572 = arith.index_cast %571 : i32 to index
    %573 = memref.load %arg5[%572] : memref<64xf32, #tpu.memory_space<smem>>
    %c20_i32_213 = arith.constant 20 : i32
    %574 = arith.addi %315, %c20_i32_213 : i32
    %c2_i32_214 = arith.constant 2 : i32
    %575 = arith.addi %574, %c2_i32_214 : i32
    %576 = arith.index_cast %575 : i32 to index
    %577 = memref.load %arg5[%576] : memref<64xf32, #tpu.memory_space<smem>>
    %c20_i32_215 = arith.constant 20 : i32
    %578 = arith.addi %315, %c20_i32_215 : i32
    %c3_i32_216 = arith.constant 3 : i32
    %579 = arith.addi %578, %c3_i32_216 : i32
    %580 = arith.index_cast %579 : i32 to index
    %581 = memref.load %arg5[%580] : memref<64xf32, #tpu.memory_space<smem>>
    %cst_217 = arith.constant 5.000000e-01 : f32
    %582 = arith.mulf %cst_217, %577 : f32
    %583 = arith.subf %569, %582 : f32
    %cst_218 = arith.constant 5.000000e-01 : f32
    %584 = arith.mulf %cst_218, %577 : f32
    %585 = arith.addf %569, %584 : f32
    %cst_219 = arith.constant 5.000000e-01 : f32
    %586 = arith.mulf %cst_219, %581 : f32
    %587 = arith.subf %573, %586 : f32
    %cst_220 = arith.constant 5.000000e-01 : f32
    %588 = arith.mulf %cst_220, %581 : f32
    %589 = arith.addf %573, %588 : f32
    %590 = vector.broadcast %585 : f32 to vector<6x128xf32>
    %591 = arith.minimumf %65, %590 : vector<6x128xf32>
    %592 = vector.broadcast %583 : f32 to vector<6x128xf32>
    %593 = arith.maximumf %62, %592 : vector<6x128xf32>
    %594 = arith.subf %591, %593 : vector<6x128xf32>
    %cst_221 = arith.constant 0.000000e+00 : f32
    %595 = vector.broadcast %cst_221 : f32 to vector<6x128xf32>
    %596 = arith.maximumf %594, %595 : vector<6x128xf32>
    %597 = vector.broadcast %589 : f32 to vector<6x128xf32>
    %598 = arith.minimumf %71, %597 : vector<6x128xf32>
    %599 = vector.broadcast %587 : f32 to vector<6x128xf32>
    %600 = arith.maximumf %68, %599 : vector<6x128xf32>
    %601 = arith.subf %598, %600 : vector<6x128xf32>
    %cst_222 = arith.constant 0.000000e+00 : f32
    %602 = vector.broadcast %cst_222 : f32 to vector<6x128xf32>
    %603 = arith.maximumf %601, %602 : vector<6x128xf32>
    %604 = arith.mulf %596, %603 : vector<6x128xf32>
    %605 = arith.mulf %577, %581 : f32
    %606 = vector.broadcast %605 : f32 to vector<6x128xf32>
    %607 = arith.addf %313, %606 : vector<6x128xf32>
    %608 = arith.subf %607, %604 : vector<6x128xf32>
    %609 = tpu.reciprocal %608 {approx = true} : vector<6x128xf32> -> vector<6x128xf32>
    %610 = arith.mulf %608, %609 : vector<6x128xf32>
    %cst_223 = arith.constant 2.000000e+00 : f32
    %611 = vector.broadcast %cst_223 : f32 to vector<6x128xf32>
    %612 = arith.subf %611, %610 : vector<6x128xf32>
    %613 = arith.mulf %609, %612 : vector<6x128xf32>
    %614 = arith.mulf %604, %613 : vector<6x128xf32>
    %615 = arith.maximumf %565, %614 : vector<6x128xf32>
    %c24_i32 = arith.constant 24 : i32
    %616 = arith.addi %315, %c24_i32 : i32
    %c0_i32_224 = arith.constant 0 : i32
    %617 = arith.addi %616, %c0_i32_224 : i32
    %618 = arith.index_cast %617 : i32 to index
    %619 = memref.load %arg5[%618] : memref<64xf32, #tpu.memory_space<smem>>
    %c24_i32_225 = arith.constant 24 : i32
    %620 = arith.addi %315, %c24_i32_225 : i32
    %c1_i32_226 = arith.constant 1 : i32
    %621 = arith.addi %620, %c1_i32_226 : i32
    %622 = arith.index_cast %621 : i32 to index
    %623 = memref.load %arg5[%622] : memref<64xf32, #tpu.memory_space<smem>>
    %c24_i32_227 = arith.constant 24 : i32
    %624 = arith.addi %315, %c24_i32_227 : i32
    %c2_i32_228 = arith.constant 2 : i32
    %625 = arith.addi %624, %c2_i32_228 : i32
    %626 = arith.index_cast %625 : i32 to index
    %627 = memref.load %arg5[%626] : memref<64xf32, #tpu.memory_space<smem>>
    %c24_i32_229 = arith.constant 24 : i32
    %628 = arith.addi %315, %c24_i32_229 : i32
    %c3_i32_230 = arith.constant 3 : i32
    %629 = arith.addi %628, %c3_i32_230 : i32
    %630 = arith.index_cast %629 : i32 to index
    %631 = memref.load %arg5[%630] : memref<64xf32, #tpu.memory_space<smem>>
    %cst_231 = arith.constant 5.000000e-01 : f32
    %632 = arith.mulf %cst_231, %627 : f32
    %633 = arith.subf %619, %632 : f32
    %cst_232 = arith.constant 5.000000e-01 : f32
    %634 = arith.mulf %cst_232, %627 : f32
    %635 = arith.addf %619, %634 : f32
    %cst_233 = arith.constant 5.000000e-01 : f32
    %636 = arith.mulf %cst_233, %631 : f32
    %637 = arith.subf %623, %636 : f32
    %cst_234 = arith.constant 5.000000e-01 : f32
    %638 = arith.mulf %cst_234, %631 : f32
    %639 = arith.addf %623, %638 : f32
    %640 = vector.broadcast %635 : f32 to vector<6x128xf32>
    %641 = arith.minimumf %65, %640 : vector<6x128xf32>
    %642 = vector.broadcast %633 : f32 to vector<6x128xf32>
    %643 = arith.maximumf %62, %642 : vector<6x128xf32>
    %644 = arith.subf %641, %643 : vector<6x128xf32>
    %cst_235 = arith.constant 0.000000e+00 : f32
    %645 = vector.broadcast %cst_235 : f32 to vector<6x128xf32>
    %646 = arith.maximumf %644, %645 : vector<6x128xf32>
    %647 = vector.broadcast %639 : f32 to vector<6x128xf32>
    %648 = arith.minimumf %71, %647 : vector<6x128xf32>
    %649 = vector.broadcast %637 : f32 to vector<6x128xf32>
    %650 = arith.maximumf %68, %649 : vector<6x128xf32>
    %651 = arith.subf %648, %650 : vector<6x128xf32>
    %cst_236 = arith.constant 0.000000e+00 : f32
    %652 = vector.broadcast %cst_236 : f32 to vector<6x128xf32>
    %653 = arith.maximumf %651, %652 : vector<6x128xf32>
    %654 = arith.mulf %646, %653 : vector<6x128xf32>
    %655 = arith.mulf %627, %631 : f32
    %656 = vector.broadcast %655 : f32 to vector<6x128xf32>
    %657 = arith.addf %313, %656 : vector<6x128xf32>
    %658 = arith.subf %657, %654 : vector<6x128xf32>
    %659 = tpu.reciprocal %658 {approx = true} : vector<6x128xf32> -> vector<6x128xf32>
    %660 = arith.mulf %658, %659 : vector<6x128xf32>
    %cst_237 = arith.constant 2.000000e+00 : f32
    %661 = vector.broadcast %cst_237 : f32 to vector<6x128xf32>
    %662 = arith.subf %661, %660 : vector<6x128xf32>
    %663 = arith.mulf %659, %662 : vector<6x128xf32>
    %664 = arith.mulf %654, %663 : vector<6x128xf32>
    %665 = arith.maximumf %615, %664 : vector<6x128xf32>
    %c28_i32 = arith.constant 28 : i32
    %666 = arith.addi %315, %c28_i32 : i32
    %c0_i32_238 = arith.constant 0 : i32
    %667 = arith.addi %666, %c0_i32_238 : i32
    %668 = arith.index_cast %667 : i32 to index
    %669 = memref.load %arg5[%668] : memref<64xf32, #tpu.memory_space<smem>>
    %c28_i32_239 = arith.constant 28 : i32
    %670 = arith.addi %315, %c28_i32_239 : i32
    %c1_i32_240 = arith.constant 1 : i32
    %671 = arith.addi %670, %c1_i32_240 : i32
    %672 = arith.index_cast %671 : i32 to index
    %673 = memref.load %arg5[%672] : memref<64xf32, #tpu.memory_space<smem>>
    %c28_i32_241 = arith.constant 28 : i32
    %674 = arith.addi %315, %c28_i32_241 : i32
    %c2_i32_242 = arith.constant 2 : i32
    %675 = arith.addi %674, %c2_i32_242 : i32
    %676 = arith.index_cast %675 : i32 to index
    %677 = memref.load %arg5[%676] : memref<64xf32, #tpu.memory_space<smem>>
    %c28_i32_243 = arith.constant 28 : i32
    %678 = arith.addi %315, %c28_i32_243 : i32
    %c3_i32_244 = arith.constant 3 : i32
    %679 = arith.addi %678, %c3_i32_244 : i32
    %680 = arith.index_cast %679 : i32 to index
    %681 = memref.load %arg5[%680] : memref<64xf32, #tpu.memory_space<smem>>
    %cst_245 = arith.constant 5.000000e-01 : f32
    %682 = arith.mulf %cst_245, %677 : f32
    %683 = arith.subf %669, %682 : f32
    %cst_246 = arith.constant 5.000000e-01 : f32
    %684 = arith.mulf %cst_246, %677 : f32
    %685 = arith.addf %669, %684 : f32
    %cst_247 = arith.constant 5.000000e-01 : f32
    %686 = arith.mulf %cst_247, %681 : f32
    %687 = arith.subf %673, %686 : f32
    %cst_248 = arith.constant 5.000000e-01 : f32
    %688 = arith.mulf %cst_248, %681 : f32
    %689 = arith.addf %673, %688 : f32
    %690 = vector.broadcast %685 : f32 to vector<6x128xf32>
    %691 = arith.minimumf %65, %690 : vector<6x128xf32>
    %692 = vector.broadcast %683 : f32 to vector<6x128xf32>
    %693 = arith.maximumf %62, %692 : vector<6x128xf32>
    %694 = arith.subf %691, %693 : vector<6x128xf32>
    %cst_249 = arith.constant 0.000000e+00 : f32
    %695 = vector.broadcast %cst_249 : f32 to vector<6x128xf32>
    %696 = arith.maximumf %694, %695 : vector<6x128xf32>
    %697 = vector.broadcast %689 : f32 to vector<6x128xf32>
    %698 = arith.minimumf %71, %697 : vector<6x128xf32>
    %699 = vector.broadcast %687 : f32 to vector<6x128xf32>
    %700 = arith.maximumf %68, %699 : vector<6x128xf32>
    %701 = arith.subf %698, %700 : vector<6x128xf32>
    %cst_250 = arith.constant 0.000000e+00 : f32
    %702 = vector.broadcast %cst_250 : f32 to vector<6x128xf32>
    %703 = arith.maximumf %701, %702 : vector<6x128xf32>
    %704 = arith.mulf %696, %703 : vector<6x128xf32>
    %705 = arith.mulf %677, %681 : f32
    %706 = vector.broadcast %705 : f32 to vector<6x128xf32>
    %707 = arith.addf %313, %706 : vector<6x128xf32>
    %708 = arith.subf %707, %704 : vector<6x128xf32>
    %709 = tpu.reciprocal %708 {approx = true} : vector<6x128xf32> -> vector<6x128xf32>
    %710 = arith.mulf %708, %709 : vector<6x128xf32>
    %cst_251 = arith.constant 2.000000e+00 : f32
    %711 = vector.broadcast %cst_251 : f32 to vector<6x128xf32>
    %712 = arith.subf %711, %710 : vector<6x128xf32>
    %713 = arith.mulf %709, %712 : vector<6x128xf32>
    %714 = arith.mulf %704, %713 : vector<6x128xf32>
    %715 = arith.maximumf %665, %714 : vector<6x128xf32>
    %cst_252 = arith.constant 1.000000e+00 : f32
    %716 = vector.broadcast %cst_252 : f32 to vector<6x128xf32>
    %717 = arith.subf %716, %19 : vector<6x128xf32>
    %718 = arith.mulf %717, %29 : vector<6x128xf32>
    %cst_253 = arith.constant 5.000000e-01 : f32
    %719 = vector.broadcast %cst_253 : f32 to vector<6x128xf32>
    %720 = arith.cmpf olt, %715, %719 : vector<6x128xf32>
    %721 = arith.extui %720 : vector<6x128xi1> to vector<6x128xi32>
    %722 = arith.sitofp %721 : vector<6x128xi32> to vector<6x128xf32>
    %723 = arith.mulf %718, %722 : vector<6x128xf32>
    %cst_254 = arith.constant 0.000000e+00 : f32
    %724 = vector.broadcast %cst_254 : f32 to vector<6x128xf32>
    %725 = arith.maximumf %9, %724 : vector<6x128xf32>
    %726 = math.absf %9 : vector<6x128xf32>
    %cst_255 = arith.constant 0.000000e+00 : f32
    %727 = vector.broadcast %cst_255 : f32 to vector<6x128xf32>
    %728 = arith.subf %727, %726 : vector<6x128xf32>
    %729 = math.exp %728 : vector<6x128xf32>
    %cst_256 = arith.constant 1.000000e+00 : f32
    %730 = vector.broadcast %cst_256 : f32 to vector<6x128xf32>
    %731 = arith.addf %730, %729 : vector<6x128xf32>
    %732 = math.log %731 : vector<6x128xf32>
    %733 = arith.addf %725, %732 : vector<6x128xf32>
    %734 = arith.subf %733, %9 : vector<6x128xf32>
    %735 = arith.mulf %19, %734 : vector<6x128xf32>
    %736 = arith.mulf %723, %733 : vector<6x128xf32>
    %737 = arith.addf %735, %736 : vector<6x128xf32>
    %738 = vector.shape_cast %242 : vector<6x128xf32> to vector<1x6x128xf32>
    %cst_257 = arith.constant dense<0.000000e+00> : vector<1xf32>
    %739 = vector.multi_reduction <add>, %738, %cst_257 [1, 2] : vector<1x6x128xf32> to vector<1xf32>
    %740 = vector.shape_cast %739 : vector<1xf32> to vector<1x1x1xf32>
    %741 = vector.extract %740[0, 0, 0] : f32 from vector<1x1x1xf32>
    %742 = vector.broadcast %741 : f32 to vector<1x1xf32>
    %743 = vector.shape_cast %737 : vector<6x128xf32> to vector<1x6x128xf32>
    %cst_258 = arith.constant dense<0.000000e+00> : vector<1xf32>
    %744 = vector.multi_reduction <add>, %743, %cst_258 [1, 2] : vector<1x6x128xf32> to vector<1xf32>
    %745 = vector.shape_cast %744 : vector<1xf32> to vector<1x1x1xf32>
    %746 = vector.extract %745[0, 0, 0] : f32 from vector<1x1x1xf32>
    %747 = vector.broadcast %746 : f32 to vector<1x1xf32>
    %748 = vector.shape_cast %312 : vector<6x128xf32> to vector<1x6x128xf32>
    %cst_259 = arith.constant dense<0.000000e+00> : vector<1xf32>
    %749 = vector.multi_reduction <add>, %748, %cst_259 [1, 2] : vector<1x6x128xf32> to vector<1xf32>
    %750 = vector.shape_cast %749 : vector<1xf32> to vector<1x1x1xf32>
    %751 = vector.extract %750[0, 0, 0] : f32 from vector<1x1x1xf32>
    %752 = vector.broadcast %751 : f32 to vector<1x1xf32>
    %c0_i32_260 = arith.constant 0 : i32
    %753 = arith.cmpi eq, %arg1, %c0_i32_260 : i32
    %754 = arith.extui %753 : i1 to i32
    %c0_i32_261 = arith.constant 0 : i32
    %755 = arith.cmpi ne, %754, %c0_i32_261 : i32
    scf.if %755 {
      %c0_264 = arith.constant 0 : index
      %c0_265 = arith.constant 0 : index
      %c0_266 = arith.constant 0 : index
      %759 = vector.load %arg6[%c0_264, %c0_265, %c0_266] : memref<1x1x1xf32, #tpu.memory_space<vmem>>, vector<1x1x1xf32>
      %760 = vector.shape_cast %759 : vector<1x1x1xf32> to vector<1x1xf32>
      %761 = vector.shape_cast %742 : vector<1x1xf32> to vector<1x1x1xf32>
      tpu.vector_store %arg6[%c0_264, %c0_265, %c0_266], %761 {strides = array<i32>} : memref<1x1x1xf32, #tpu.memory_space<vmem>>, vector<1x1x1xf32>,
      %c0_267 = arith.constant 0 : index
      %c0_268 = arith.constant 0 : index
      %c0_269 = arith.constant 0 : index
      %762 = vector.load %arg7[%c0_267, %c0_268, %c0_269] : memref<1x1x1xf32, #tpu.memory_space<vmem>>, vector<1x1x1xf32>
      %763 = vector.shape_cast %762 : vector<1x1x1xf32> to vector<1x1xf32>
      %764 = vector.shape_cast %747 : vector<1x1xf32> to vector<1x1x1xf32>
      tpu.vector_store %arg7[%c0_267, %c0_268, %c0_269], %764 {strides = array<i32>} : memref<1x1x1xf32, #tpu.memory_space<vmem>>, vector<1x1x1xf32>,
      %c0_270 = arith.constant 0 : index
      %c0_271 = arith.constant 0 : index
      %c0_272 = arith.constant 0 : index
      %765 = vector.load %arg8[%c0_270, %c0_271, %c0_272] : memref<1x1x1xf32, #tpu.memory_space<vmem>>, vector<1x1x1xf32>
      %766 = vector.shape_cast %765 : vector<1x1x1xf32> to vector<1x1xf32>
      %767 = vector.shape_cast %752 : vector<1x1xf32> to vector<1x1x1xf32>
      tpu.vector_store %arg8[%c0_270, %c0_271, %c0_272], %767 {strides = array<i32>} : memref<1x1x1xf32, #tpu.memory_space<vmem>>, vector<1x1x1xf32>,
    } else {
    }
    %c0_i32_262 = arith.constant 0 : i32
    %756 = arith.cmpi sgt, %arg1, %c0_i32_262 : i32
    %757 = arith.extui %756 : i1 to i32
    %c0_i32_263 = arith.constant 0 : i32
    %758 = arith.cmpi ne, %757, %c0_i32_263 : i32
    scf.if %758 {
      %c0_264 = arith.constant 0 : index
      %c0_265 = arith.constant 0 : index
      %c0_266 = arith.constant 0 : index
      %759 = vector.load %arg6[%c0_264, %c0_265, %c0_266] : memref<1x1x1xf32, #tpu.memory_space<vmem>>, vector<1x1x1xf32>
      %760 = vector.shape_cast %759 : vector<1x1x1xf32> to vector<1x1xf32>
      %761 = arith.addf %760, %742 : vector<1x1xf32>
      %c0_267 = arith.constant 0 : index
      %c0_268 = arith.constant 0 : index
      %c0_269 = arith.constant 0 : index
      %762 = vector.load %arg6[%c0_267, %c0_268, %c0_269] : memref<1x1x1xf32, #tpu.memory_space<vmem>>, vector<1x1x1xf32>
      %763 = vector.shape_cast %762 : vector<1x1x1xf32> to vector<1x1xf32>
      %764 = vector.shape_cast %761 : vector<1x1xf32> to vector<1x1x1xf32>
      tpu.vector_store %arg6[%c0_267, %c0_268, %c0_269], %764 {strides = array<i32>} : memref<1x1x1xf32, #tpu.memory_space<vmem>>, vector<1x1x1xf32>,
      %c0_270 = arith.constant 0 : index
      %c0_271 = arith.constant 0 : index
      %c0_272 = arith.constant 0 : index
      %765 = vector.load %arg7[%c0_270, %c0_271, %c0_272] : memref<1x1x1xf32, #tpu.memory_space<vmem>>, vector<1x1x1xf32>
      %766 = vector.shape_cast %765 : vector<1x1x1xf32> to vector<1x1xf32>
      %767 = arith.addf %766, %747 : vector<1x1xf32>
      %c0_273 = arith.constant 0 : index
      %c0_274 = arith.constant 0 : index
      %c0_275 = arith.constant 0 : index
      %768 = vector.load %arg7[%c0_273, %c0_274, %c0_275] : memref<1x1x1xf32, #tpu.memory_space<vmem>>, vector<1x1x1xf32>
      %769 = vector.shape_cast %768 : vector<1x1x1xf32> to vector<1x1xf32>
      %770 = vector.shape_cast %767 : vector<1x1xf32> to vector<1x1x1xf32>
      tpu.vector_store %arg7[%c0_273, %c0_274, %c0_275], %770 {strides = array<i32>} : memref<1x1x1xf32, #tpu.memory_space<vmem>>, vector<1x1x1xf32>,
      %c0_276 = arith.constant 0 : index
      %c0_277 = arith.constant 0 : index
      %c0_278 = arith.constant 0 : index
      %771 = vector.load %arg8[%c0_276, %c0_277, %c0_278] : memref<1x1x1xf32, #tpu.memory_space<vmem>>, vector<1x1x1xf32>
      %772 = vector.shape_cast %771 : vector<1x1x1xf32> to vector<1x1xf32>
      %773 = arith.addf %772, %752 : vector<1x1xf32>
      %c0_279 = arith.constant 0 : index
      %c0_280 = arith.constant 0 : index
      %c0_281 = arith.constant 0 : index
      %774 = vector.load %arg8[%c0_279, %c0_280, %c0_281] : memref<1x1x1xf32, #tpu.memory_space<vmem>>, vector<1x1x1xf32>
      %775 = vector.shape_cast %774 : vector<1x1x1xf32> to vector<1x1xf32>
      %776 = vector.shape_cast %773 : vector<1x1xf32> to vector<1x1x1xf32>
      tpu.vector_store %arg8[%c0_279, %c0_280, %c0_281], %776 {strides = array<i32>} : memref<1x1x1xf32, #tpu.memory_space<vmem>>, vector<1x1x1xf32>,
    } else {
    }
    return
  }
  func.func @transform_0(%arg0: i32, %arg1: i32) -> (i32, i32, i32, i32) {
    %c0_i32 = arith.constant 0 : i32
    %c0_i32_0 = arith.constant 0 : i32
    %c0_i32_1 = arith.constant 0 : i32
    return %arg0, %c0_i32, %arg1, %c0_i32_0 : i32, i32, i32, i32
  }
  func.func @transform_1(%arg0: i32, %arg1: i32) -> (i32, i32, i32, i32) {
    %c0_i32 = arith.constant 0 : i32
    %c0_i32_0 = arith.constant 0 : i32
    %c0_i32_1 = arith.constant 0 : i32
    return %arg0, %c0_i32, %arg1, %c0_i32_0 : i32, i32, i32, i32
  }
  func.func @transform_2(%arg0: i32, %arg1: i32) -> (i32, i32, i32) {
    %c0_i32 = arith.constant 0 : i32
    %c0_i32_0 = arith.constant 0 : i32
    %c0_i32_1 = arith.constant 0 : i32
    return %c0_i32, %arg1, %c0_i32_0 : i32, i32, i32
  }
  func.func @transform_3(%arg0: i32, %arg1: i32) -> i32 {
    %c0_i32 = arith.constant 0 : i32
    %c0_i32_0 = arith.constant 0 : i32
    return %c0_i32 : i32
  }
  func.func @transform_4(%arg0: i32, %arg1: i32) -> (i32, i32, i32) {
    %c0_i32 = arith.constant 0 : i32
    %c0_i32_0 = arith.constant 0 : i32
    %c0_i32_1 = arith.constant 0 : i32
    return %arg0, %c0_i32, %c0_i32_0 : i32, i32, i32
  }
  func.func @transform_5(%arg0: i32, %arg1: i32) -> (i32, i32, i32) {
    %c0_i32 = arith.constant 0 : i32
    %c0_i32_0 = arith.constant 0 : i32
    %c0_i32_1 = arith.constant 0 : i32
    return %arg0, %c0_i32, %c0_i32_0 : i32, i32, i32
  }
  func.func @transform_6(%arg0: i32, %arg1: i32) -> (i32, i32, i32) {
    %c0_i32 = arith.constant 0 : i32
    %c0_i32_0 = arith.constant 0 : i32
    %c0_i32_1 = arith.constant 0 : i32
    return %arg0, %c0_i32, %c0_i32_0 : i32, i32, i32
  }
}

</mosaic_0001>

<llo_original>
// kernel: tpu_custom_call.1
$region0: #{tpu_custom_call.1}
  #allocation0 [shape = 'u32[]', space=smem, size = 0x4, offset = 0x4, fixed_abs, tag = 'smem constant byte address 0x4 - core index']
  #allocation1 [shape = 'u32[72,128]{1,0:T(1,128)}', space=vmem, size = 0x9000, scoped, tag = 'internal scratch']
  %s0 = inlined_call_operand.vmem [shape: f32[2,9,6,128], index: 0, kind: input, shape index: {}]
  %s1 = inlined_call_operand.vmem [shape: f32[2,9,6,128], index: 1, kind: input, shape index: {}]
  %s2 = inlined_call_operand.vmem [shape: f32[5,6,128], index: 2, kind: input, shape index: {}]
  %s3 = inlined_call_operand.vmem [shape: f32[64], index: 3, kind: input, shape index: {}]
  %s4 = inlined_call_operand.vmem [shape: f32[2,1,1], index: 4, kind: output, shape index: {0}]
  %s5 = inlined_call_operand.vmem [shape: f32[2,1,1], index: 5, kind: output, shape index: {1}]
  %s6 = inlined_call_operand.vmem [shape: f32[2,1,1], index: 6, kind: output, shape index: {2}]
  %7 = xla_tuple %s4, %s5, %s6
  %s8 = sld [smem:[#allocation0]]
  $region77: #{tpu_custom_call.1} parent=0
    _
  %s10 = ssub.s32 1, %s8
  %s11 = scalar_select 0, %s10, %s8
  $region1: #{tpu_custom_call.1} parent=0
    #allocation2 [shape = 'u8[512]{0}', space=smem, size = 0x200, scoped, tag = 'input window, operand 3, single buffered']
    #allocation3 [shape = 's32[2]{0}', space=sflag, size = 0x8, scoped, tag = 'scoped memory for tpu_custom_call.1']
    %12 = vsyncpa [#allocation3], 0
    loop: start=0, step=1, limit=4
    $region2: #{tpu_custom_call.1} parent=1 // loop_pre_header
      _
    $region3: #{tpu_custom_call.1} parent=1 // loop_header
      %s14 = sphi 0, %s18
      %p15 = scmp.ge.s32.totalorder %s14, 4
      %s21 = sphi 0, %s33
      %s22 = sphi 0, %s29
      %s23 = sphi 0, %s21
      %s24 = sphi 0, %s22
      %s25 = sphi 0, %s23
      %s26 = sphi 0, %s24
      %s38 = sphi 0, %s40
      %s41 = sphi 0, %s38
      %s42 = sphi 0, %s41
      %s58 = sphi 0, %s42
      %s66 = sphi 0, %s68
      %s69 = sphi 0, %s66
      %s70 = sphi 0, %s69
      %s86 = sphi 0, %s70
      %s92 = sphi 0, %s94
      %s95 = sphi 0, %s92
      %s96 = sphi 0, %s95
      %s112 = sphi 0, %s96
      %s116 = sphi 0, %s116
      %s118 = sphi 0, %s116
      %s119 = sphi 0, %s118
      %s133 = sphi 0, %s119
      %s139 = sphi 0, %s141
      %s142 = sphi 0, %s139
      %s143 = sphi 0, %s142
      %s159 = sphi 0, %s143
      %s165 = sphi 0, %s167
      %s168 = sphi 0, %s165
      %s169 = sphi 0, %s168
      %s185 = sphi 0, %s169
      %s191 = sphi 0, %s193
      %s194 = sphi 0, %s191
      %s195 = sphi 0, %s194
      %s211 = sphi 0, %s195
    $region4: #{tpu_custom_call.1} parent=1 // loop_header_branch
      %17 = sbr.rel (%p15) target = $region8
    $region5: #{tpu_custom_call.1} parent=1 // loop_body
      %s19 = ssub.s32 %s14, 1
      %s20 = ssub.s32 %s14, 2
      %s27 = sadd.s32 1, %s22
      %p28 = scmp.ge.s32.totalorder %s27, 1
      %s29 = scalar_select %p28, 0, %s27
      %s30 = sadd.s32 1, %s21
      %s31 = scalar_select %p28, %s30, %s21
      %p32 = scmp.ge.s32.totalorder %s31, 2
      %s33 = scalar_select %p32, 0, %s31
      %s34 = ssub.s32 %s21, %s33
      %s35 = ssub.s32 %s22, %s29
      %s36 = sor.u32 %s34, %s35
      %p37 = scmp.eq.s32.totalorder %s36, 0
      %s39 = sadd.s32 %s38, 1
      %s40 = scalar_select %p37, %s38, %s39
      %p43 = pneg %p37
      %p44 = scmp.eq.s32.totalorder %s14, 1
      %p45 = por %p43, %p44
      %p46 = scmp.ne.s32.totalorder %s38, %s41
      %p47 = scmp.eq.s32.totalorder %s14, 0
      %p48 = por %p46, %p47
      %p49 = scmp.ne.s32.totalorder %s38, %s41
      %p50 = scmp.eq.s32.totalorder %s19, 1
      %p51 = por %p49, %p50
      %p52 = scmp.ne.s32.totalorder %s41, %s42
      %p53 = scmp.eq.s32.totalorder %s19, 0
      %p54 = por %p52, %p53
      %p55 = scmp.ne.s32.totalorder %s41, %s42
      %p56 = scmp.eq.s32.totalorder %s20, 1
      %p57 = por %p55, %p56
      %p59 = scmp.ne.s32.totalorder %s42, %s58
      %p60 = scmp.eq.s32.totalorder %s20, 0
      %p61 = por %p59, %p60
      %s62 = ssub.s32 %s21, %s33
      %s63 = ssub.s32 %s22, %s29
      %s64 = sor.u32 %s62, %s63
      %p65 = scmp.eq.s32.totalorder %s64, 0
      %s67 = sadd.s32 %s66, 1
      %s68 = scalar_select %p65, %s66, %s67
      %p71 = pneg %p65
      %p72 = scmp.eq.s32.totalorder %s14, 1
      %p73 = por %p71, %p72
      %p74 = scmp.ne.s32.totalorder %s66, %s69
      %p75 = scmp.eq.s32.totalorder %s14, 0
      %p76 = por %p74, %p75
      %p77 = scmp.ne.s32.totalorder %s66, %s69
      %p78 = scmp.eq.s32.totalorder %s19, 1
      %p79 = por %p77, %p78
      %p80 = scmp.ne.s32.totalorder %s69, %s70
      %p81 = scmp.eq.s32.totalorder %s19, 0
      %p82 = por %p80, %p81
      %p83 = scmp.ne.s32.totalorder %s69, %s70
      %p84 = scmp.eq.s32.totalorder %s20, 1
      %p85 = por %p83, %p84
      %p87 = scmp.ne.s32.totalorder %s70, %s86
      %p88 = scmp.eq.s32.totalorder %s20, 0
      %p89 = por %p87, %p88
      %s90 = ssub.s32 %s22, %s29
      %p91 = scmp.eq.s32.totalorder %s90, 0
      %s93 = sadd.s32 %s92, 1
      %s94 = scalar_select %p91, %s92, %s93
      %p97 = pneg %p91
      %p98 = scmp.eq.s32.totalorder %s14, 1
      %p99 = por %p97, %p98
      %p100 = scmp.ne.s32.totalorder %s92, %s95
      %p101 = scmp.eq.s32.totalorder %s14, 0
      %p102 = por %p100, %p101
      %p103 = scmp.ne.s32.totalorder %s92, %s95
      %p104 = scmp.eq.s32.totalorder %s19, 1
      %p105 = por %p103, %p104
      %p106 = scmp.ne.s32.totalorder %s95, %s96
      %p107 = scmp.eq.s32.totalorder %s19, 0
      %p108 = por %p106, %p107
      %p109 = scmp.ne.s32.totalorder %s95, %s96
      %p110 = scmp.eq.s32.totalorder %s20, 1
      %p111 = por %p109, %p110
      %p113 = scmp.ne.s32.totalorder %s96, %s112
      %p114 = scmp.eq.s32.totalorder %s20, 0
      %p115 = por %p113, %p114
      %s117 = sadd.s32 %s116, 1
      %p120 = scmp.eq.s32.totalorder %s14, 1
      %p121 = scmp.ne.s32.totalorder %s116, %s118
      %p122 = scmp.eq.s32.totalorder %s14, 0
      %p123 = por %p121, %p122
      %p124 = scmp.ne.s32.totalorder %s116, %s118
      %p125 = scmp.eq.s32.totalorder %s19, 1
      %p126 = por %p124, %p125
      %p127 = scmp.ne.s32.totalorder %s118, %s119
      %p128 = scmp.eq.s32.totalorder %s19, 0
      %p129 = por %p127, %p128
      %p130 = scmp.ne.s32.totalorder %s118, %s119
      %p131 = scmp.eq.s32.totalorder %s20, 1
      %p132 = por %p130, %p131
      %p134 = scmp.ne.s32.totalorder %s119, %s133
      %p135 = scmp.eq.s32.totalorder %s20, 0
      %p136 = por %p134, %p135
      %s137 = ssub.s32 %s21, %s33
      %p138 = scmp.eq.s32.totalorder %s137, 0
      %s140 = sadd.s32 %s139, 1
      %s141 = scalar_select %p138, %s139, %s140
      %p144 = pneg %p138
      %p145 = scmp.eq.s32.totalorder %s14, 1
      %p146 = por %p144, %p145
      %p147 = scmp.ne.s32.totalorder %s139, %s142
      %p148 = scmp.eq.s32.totalorder %s14, 0
      %p149 = por %p147, %p148
      %p150 = scmp.ne.s32.totalorder %s139, %s142
      %p151 = scmp.eq.s32.totalorder %s19, 1
      %p152 = por %p150, %p151
      %p153 = scmp.ne.s32.totalorder %s142, %s143
      %p154 = scmp.eq.s32.totalorder %s19, 0
      %p155 = por %p153, %p154
      %p156 = scmp.ne.s32.totalorder %s142, %s143
      %p157 = scmp.eq.s32.totalorder %s20, 1
      %p158 = por %p156, %p157
      %p160 = scmp.ne.s32.totalorder %s143, %s159
      %p161 = scmp.eq.s32.totalorder %s20, 0
      %p162 = por %p160, %p161
      %s163 = ssub.s32 %s21, %s33
      %p164 = scmp.eq.s32.totalorder %s163, 0
      %s166 = sadd.s32 %s165, 1
      %s167 = scalar_select %p164, %s165, %s166
      %p170 = pneg %p164
      %p171 = scmp.eq.s32.totalorder %s14, 1
      %p172 = por %p170, %p171
      %p173 = scmp.ne.s32.totalorder %s165, %s168
      %p174 = scmp.eq.s32.totalorder %s14, 0
      %p175 = por %p173, %p174
      %p176 = scmp.ne.s32.totalorder %s165, %s168
      %p177 = scmp.eq.s32.totalorder %s19, 1
      %p178 = por %p176, %p177
      %p179 = scmp.ne.s32.totalorder %s168, %s169
      %p180 = scmp.eq.s32.totalorder %s19, 0
      %p181 = por %p179, %p180
      %p182 = scmp.ne.s32.totalorder %s168, %s169
      %p183 = scmp.eq.s32.totalorder %s20, 1
      %p184 = por %p182, %p183
      %p186 = scmp.ne.s32.totalorder %s169, %s185
      %p187 = scmp.eq.s32.totalorder %s20, 0
      %p188 = por %p186, %p187
      %s189 = ssub.s32 %s21, %s33
      %p190 = scmp.eq.s32.totalorder %s189, 0
      %s192 = sadd.s32 %s191, 1
      %s193 = scalar_select %p190, %s191, %s192
      %p196 = pneg %p190
      %p197 = scmp.eq.s32.totalorder %s14, 1
      %p198 = por %p196, %p197
      %p199 = scmp.ne.s32.totalorder %s191, %s194
      %p200 = scmp.eq.s32.totalorder %s14, 0
      %p201 = por %p199, %p200
      %p202 = scmp.ne.s32.totalorder %s191, %s194
      %p203 = scmp.eq.s32.totalorder %s19, 1
      %p204 = por %p202, %p203
      %p205 = scmp.ne.s32.totalorder %s194, %s195
      %p206 = scmp.eq.s32.totalorder %s19, 0
      %p207 = por %p205, %p206
      %p208 = scmp.ne.s32.totalorder %s194, %s195
      %p209 = scmp.eq.s32.totalorder %s20, 1
      %p210 = por %p208, %p209
      %p212 = scmp.ne.s32.totalorder %s195, %s211
      %p213 = scmp.eq.s32.totalorder %s20, 0
      %p214 = por %p212, %p213
      %p215 = scmp.le.s32.totalorder 1, %s14
      %p216 = scmp.lt.s32.totalorder %s14, 3
      %p217 = pnand %p215, %p216
      %p218 = pneg %p217
      // Predicated region
      $region9: #{tpu_custom_call.1} parent=5 // pred_check
        _
      $region10: #{tpu_custom_call.1} parent=5 // pred_check_branch
        %220 = sbr.rel (%p217) target = $region12
      $region11: #{tpu_custom_call.1} parent=5 // pred_region
        %s221 = ssub.s32 %s14, 1
        // Predicated region
        $region13: #{tpu_custom_call.1} parent=11 // pred_check
          %p222 = pneg %p108
        $region14: #{tpu_custom_call.1} parent=11 // pred_check_branch
          %224 = sbr.rel (%p222) target = $region16
        $region15: #{tpu_custom_call.1} parent=11 // pred_region
          %p225 = scmp.lt.s32.totalorder %s24, 0
          %s226 = scalar_select %p225, %s24, 0
          %s227 = smul.addr %s226, 8
          %s228 = scalar_lea.vmem %s2, %s227
        $region16: #{tpu_custom_call.1} parent=11 // pred_fallthru
          _
        // Predicated region
        $region17: #{tpu_custom_call.1} parent=11 // pred_check
          %p229 = pneg %p129
        $region18: #{tpu_custom_call.1} parent=11 // pred_check_branch
          %231 = sbr.rel (%p229) target = $region20
        $region19: #{tpu_custom_call.1} parent=11 // pred_region
          %233 = vsyncadd [#allocation3], 0
          %s235 = sshll.u32 %s3, 4
          %s236 = int_to_ptr.vmem [resolvable:$true] %s235
          %238 = dma.vmem_to_smem %s236, 16, [#allocation2], [#allocation3]
        $region20: #{tpu_custom_call.1} parent=11 // pred_fallthru
          _
      $region12: #{tpu_custom_call.1} parent=5 // pred_fallthru
        _
      %p239 = scmp.lt.s32.totalorder %s14, 2
      // Predicated region
      $region21: #{tpu_custom_call.1} parent=5 // pred_check
        %p240 = pneg %p239
      $region22: #{tpu_custom_call.1} parent=5 // pred_check_branch
        %242 = sbr.rel (%p240) target = $region24
      $region23: #{tpu_custom_call.1} parent=5 // pred_region
        // Predicated region
        $region25: #{tpu_custom_call.1} parent=23 // pred_check
          %p243 = pneg %p48
        $region26: #{tpu_custom_call.1} parent=23 // pred_check_branch
          %245 = sbr.rel (%p243) target = $region28
        $region27: #{tpu_custom_call.1} parent=23 // pred_region
          %p246 = scmp.lt.s32.totalorder %s21, 1
          %s247 = scalar_select %p246, %s21, 1
          %p248 = scmp.lt.s32.totalorder %s22, 0
          %s249 = scalar_select %p248, %s22, 0
          %s250 = smul.addr %s247, 9
          %s251 = sadd.s32 %s249, %s250
          %s252 = smul.addr %s251, 8
          %s253 = scalar_lea.vmem %s0, %s252
        $region28: #{tpu_custom_call.1} parent=23 // pred_fallthru
          _
        // Predicated region
        $region29: #{tpu_custom_call.1} parent=23 // pred_check
          %p254 = pneg %p76
        $region30: #{tpu_custom_call.1} parent=23 // pred_check_branch
          %256 = sbr.rel (%p254) target = $region32
        $region31: #{tpu_custom_call.1} parent=23 // pred_region
          %p257 = scmp.lt.s32.totalorder %s21, 1
          %s258 = scalar_select %p257, %s21, 1
          %p259 = scmp.lt.s32.totalorder %s22, 0
          %s260 = scalar_select %p259, %s22, 0
          %s261 = smul.addr %s258, 9
          %s262 = sadd.s32 %s260, %s261
          %s263 = smul.addr %s262, 8
          %s264 = scalar_lea.vmem %s1, %s263
        $region32: #{tpu_custom_call.1} parent=23 // pred_fallthru
          _
      $region24: #{tpu_custom_call.1} parent=5 // pred_fallthru
        _
      %p265 = scmp.le.s32.totalorder 1, %s14
      %p266 = scmp.lt.s32.totalorder %s14, 3
      %p267 = pnand %p265, %p266
      %p268 = pneg %p267
      // Predicated region
      $region33: #{tpu_custom_call.1} parent=5 // pred_check
        _
      $region34: #{tpu_custom_call.1} parent=5 // pred_check_branch
        %270 = sbr.rel (%p267) target = $region36
      $region35: #{tpu_custom_call.1} parent=5 // pred_region
        %s271 = ssub.s32 %s14, 1
        // Predicated region
        $region37: #{tpu_custom_call.1} parent=35 // pred_check
          %p272 = pneg %p129
        $region38: #{tpu_custom_call.1} parent=35 // pred_check_branch
          %274 = sbr.rel (%p272) target = $region40
        $region39: #{tpu_custom_call.1} parent=35 // pred_region
          %276 = dma.done [#allocation3], 16
        $region40: #{tpu_custom_call.1} parent=35 // pred_fallthru
          _
        %277 = sfence
        %p278 = scmp.lt.s32.totalorder %s23, 1
        %s279 = scalar_select %p278, %s23, 1
        %p280 = scmp.lt.s32.totalorder %s24, 0
        %s281 = scalar_select %p280, %s24, 0
        %s282 = smul.addr %s279, 9
        %s283 = sadd.s32 %s281, %s282
        %s284 = smul.addr %s283, 8
        %s285 = scalar_lea.vmem %s0, %s284
        %p286 = pneg %p54
        %p287 = pneg %p51
        %p288 = scmp.lt.s32.totalorder %s23, 1
        %s289 = scalar_select %p288, %s23, 1
        %p290 = scmp.lt.s32.totalorder %s24, 0
        %s291 = scalar_select %p290, %s24, 0
        %s292 = smul.addr %s289, 9
        %s293 = sadd.s32 %s291, %s292
        %s294 = smul.addr %s293, 8
        %s295 = scalar_lea.vmem %s1, %s294
        %p296 = pneg %p82
        %p297 = pneg %p79
        %p298 = scmp.lt.s32.totalorder %s24, 0
        %s299 = scalar_select %p298, %s24, 0
        %s300 = smul.addr %s299, 8
        %s301 = scalar_lea.vmem %s2, %s300
        %p302 = pneg %p108
        %p303 = pneg %p105
        %p304 = pneg %p129
        %p305 = pneg %p126
        %p306 = pneg %p155
        %p307 = pneg %p152
        %p308 = scmp.lt.s32.totalorder %s23, 1
        %s309 = scalar_select %p308, %s23, 1
        %s310 = scalar_lea.vmem %s4, %s309
        %p311 = pneg %p181
        %p312 = pneg %p178
        %p313 = scmp.lt.s32.totalorder %s23, 1
        %s314 = scalar_select %p313, %s23, 1
        %s315 = scalar_lea.vmem %s5, %s314
        %p316 = pneg %p207
        %p317 = pneg %p204
        %p318 = scmp.lt.s32.totalorder %s23, 1
        %s319 = scalar_select %p318, %s23, 1
        %s320 = scalar_lea.vmem %s6, %s319
        %p321 = scmp.lt.s32.totalorder %s23, 1
        %s322 = scalar_select %p321, %s23, 1
        %p323 = scmp.lt.s32.totalorder %s24, 0
        %s324 = scalar_select %p323, %s24, 0
        %s325 = smul.addr %s322, 9
        %s326 = sadd.s32 %s324, %s325
        %s327 = smul.addr %s326, 8
        %s328 = scalar_lea.vmem %s0, %s327
        %p329 = scmp.lt.s32.totalorder %s23, 1
        %s330 = scalar_select %p329, %s23, 1
        %p331 = scmp.lt.s32.totalorder %s24, 0
        %s332 = scalar_select %p331, %s24, 0
        %s333 = smul.addr %s330, 9
        %s334 = sadd.s32 %s332, %s333
        %s335 = smul.addr %s334, 8
        %s336 = scalar_lea.vmem %s1, %s335
        %p337 = scmp.lt.s32.totalorder %s24, 0
        %s338 = scalar_select %p337, %s24, 0
        %s339 = smul.addr %s338, 8
        %s340 = scalar_lea.vmem %s2, %s339
        %p341 = scmp.lt.s32.totalorder %s23, 1
        %s342 = scalar_select %p341, %s23, 1
        %s343 = scalar_lea.vmem %s4, %s342
        %p344 = scmp.lt.s32.totalorder %s23, 1
        %s345 = scalar_select %p344, %s23, 1
        %s346 = scalar_lea.vmem %s5, %s345
        %p347 = scmp.lt.s32.totalorder %s23, 1
        %s348 = scalar_select %p347, %s23, 1
        %s349 = scalar_lea.vmem %s6, %s348
        %v350 = vld [vmem:[%s328] sm:$0x3f]
        %s351 = scalar_lea.vmem %s328, 8
        %v352 = vld [vmem:[%s351] sm:$0x3f]
        %s353 = scalar_lea.vmem %s328, 16
        %v354 = vld [vmem:[%s353] sm:$0x3f]
        %s355 = scalar_lea.vmem %s328, 24
        %v356 = vld [vmem:[%s355] sm:$0x3f]
        %s357 = scalar_lea.vmem %s328, 32
        %v358 = vld [vmem:[%s357] sm:$0x3f]
        %v359 = vld [vmem:[%s336] sm:$0x3f]
        %s360 = scalar_lea.vmem %s336, 8
        %v361 = vld [vmem:[%s360] sm:$0x3f]
        %s362 = scalar_lea.vmem %s336, 16
        %v363 = vld [vmem:[%s362] sm:$0x3f]
        %s364 = scalar_lea.vmem %s336, 24
        %v365 = vld [vmem:[%s364] sm:$0x3f]
        %s366 = scalar_lea.vmem %s336, 32
        %v367 = vld [vmem:[%s366] sm:$0x3f]
        %v368 = vld [vmem:[%s340] sm:$0x3f]
        %s369 = scalar_lea.vmem %s340, 8
        %v370 = vld [vmem:[%s369] sm:$0x3f]
        %s371 = scalar_lea.vmem %s340, 16
        %v372 = vld [vmem:[%s371] sm:$0x3f]
        %s373 = scalar_lea.vmem %s340, 24
        %v374 = vld [vmem:[%s373] sm:$0x3f]
        %s375 = scalar_lea.vmem %s340, 32
        %v376 = vld [vmem:[%s375] sm:$0x3f]
        %v377 = vsub.f32 0.0, %v350
        %v378 = vmul.f32 %v377, 1.442695
        %v379 = vpow.pop %v378
        %v380 = vadd.f32 %v379, 1.0
        %v381 = vrcp.pop %v380
        %v382 = vmul.f32 %v380, %v381
        %v383 = vsub.f32 2.0, %v382
        %v384 = vmul.f32 %v381, %v383
        %v385 = vadd.f32 %v384, %v368
        %v386 = vmul.f32 %v385, 8.0
        %v387 = vsub.f32 0.0, %v352
        %v388 = vmul.f32 %v387, 1.442695
        %v389 = vpow.pop %v388
        %v390 = vadd.f32 %v389, 1.0
        %v391 = vrcp.pop %v390
        %v392 = vmul.f32 %v390, %v391
        %v393 = vsub.f32 2.0, %v392
        %v394 = vmul.f32 %v391, %v393
        %v395 = vadd.f32 %v394, %v370
        %v396 = vmul.f32 %v395, 8.0
        %v397 = vmul.f32 %v354, 1.442695
        %v398 = vpow.pop %v397
        %v399 = vmul.f32 %v398, %v372
        %v400 = vmul.f32 %v356, 1.442695
        %v401 = vpow.pop %v400
        %v402 = vmul.f32 %v401, %v374
        %v403 = vmul.f32 %v399, 0.5
        %v404 = vsub.f32 %v386, %v403
        %v405 = vadd.f32 %v386, %v403
        %v406 = vmul.f32 %v402, 0.5
        %v407 = vsub.f32 %v396, %v406
        %v408 = vadd.f32 %v396, %v406
        %v409 = vmul.f32 %v363, 0.5
        %v410 = vsub.f32 %v359, %v409
        %v411 = vadd.f32 %v359, %v409
        %v412 = vmul.f32 %v365, 0.5
        %v413 = vsub.f32 %v361, %v412
        %v414 = vadd.f32 %v361, %v412
        %v415 = vmin.f32 %v404, %v405
        %v416 = vmax.f32 %v404, %v405
        %v417 = vmin.f32 %v407, %v408
        %v418 = vmax.f32 %v407, %v408
        %v419 = vmin.f32 %v410, %v411
        %v420 = vmax.f32 %v410, %v411
        %v421 = vmin.f32 %v413, %v414
        %v422 = vmax.f32 %v413, %v414
        %v423 = vsub.f32 %v416, %v415
        %v424 = vsub.f32 %v418, %v417
        %v425 = vmul.f32 %v423, %v424
        %v426 = vsub.f32 %v420, %v419
        %v427 = vsub.f32 %v422, %v421
        %v428 = vmul.f32 %v426, %v427
        %v429 = vmin.f32 %v416, %v420
        %v430 = vmax.f32 %v415, %v419
        %v431 = vsub.f32 %v429, %v430
        %v432 = vmax.f32 %v431, 0.0
        %v433 = vmin.f32 %v418, %v422
        %v434 = vmax.f32 %v417, %v421
        %v435 = vsub.f32 %v433, %v434
        %v436 = vmax.f32 %v435, 0.0
        %v437 = vmul.f32 %v432, %v436
        %v438 = vadd.f32 %v425, %v428
        %v439 = vsub.f32 %v438, %v437
        %v440 = vadd.f32 %v439, 1e-09
        %v441 = vrcp.pop %v440
        %v442 = vmul.f32 %v440, %v441
        %v443 = vsub.f32 2.0, %v442
        %v444 = vmul.f32 %v441, %v443
        %v445 = vmul.f32 %v437, %v444
        %v446 = vmax.f32 %v416, %v420
        %v447 = vmin.f32 %v415, %v419
        %v448 = vsub.f32 %v446, %v447
        %v449 = vmax.f32 %v418, %v422
        %v450 = vmin.f32 %v417, %v421
        %v451 = vsub.f32 %v449, %v450
        %v452 = vmul.f32 %v448, %v448
        %v453 = vmul.f32 %v451, %v451
        %v454 = vadd.f32 %v452, %v453
        %v455 = vsub.f32 %v386, %v359
        %v456 = vsub.f32 %v396, %v361
        %v457 = vmul.f32 %v455, %v455
        %v458 = vmul.f32 %v456, %v456
        %v459 = vadd.f32 %v457, %v458
        %v460 = vadd.f32 %v402, 1e-09
        %v461 = vrcp.pop %v460
        %v462 = vmul.f32 %v460, %v461
        %v463 = vsub.f32 2.0, %v462
        %v464 = vmul.f32 %v461, %v463
        %v465 = vmul.f32 %v399, %v464
        %v466 = vadd.f32 %v365, 1e-09
        %v467 = vrcp.pop %v466
        %v468 = vmul.f32 %v466, %v467
        %v469 = vsub.f32 2.0, %v468
        %v470 = vmul.f32 %v467, %v469
        %v471 = vmul.f32 %v363, %v470
        %v472 = vsub.f32 %v465, %v471
        %v473 = vmul.f32 %v465, %v471
        %v474 = vadd.f32 %v473, 1.0
        %v475 = vrcp.pop %v474
        %v476 = vmul.f32 %v474, %v475
        %v477 = vsub.f32 2.0, %v476
        %v478 = vmul.f32 %v475, %v477
        %v479 = vmul.f32 %v472, %v478
        %vm480 = vcmp.lt.f32.partialorder %v479, 0.0
        %v481 = vsel %vm480, -1.0, 1.0
        %v482 = vand.u32 2147483647, %v479
        %vm483 = vcmp.gt.f32.partialorder %v482, 2.4142137
        %vm484 = vcmp.gt.f32.partialorder %v482, 0.41421357
        %vm485 = vmxor %vm483, 1
        %vm486 = vmand %vm484, %vm485
        %v487 = vsel %vm486, 0.7853982, 0.0
        %v488 = vsel %vm483, 1.5707964, %v487
        %v489 = vmax.f32 %v482, 1e-30
        %v490 = vrcp.pop %v489
        %v491 = vmul.f32 %v489, %v490
        %v492 = vsub.f32 2.0, %v491
        %v493 = vmul.f32 %v490, %v492
        %v494 = vsub.f32 0.0, %v493
        %v495 = vsub.f32 %v482, 1.0
        %v496 = vadd.f32 %v482, 1.0
        %v497 = vrcp.pop %v496
        %v498 = vmul.f32 %v496, %v497
        %v499 = vsub.f32 2.0, %v498
        %v500 = vmul.f32 %v497, %v499
        %v501 = vmul.f32 %v495, %v500
        %v502 = vsel %vm486, %v501, %v482
        %v503 = vsel %vm483, %v494, %v502
        %v504 = vmul.f32 %v503, %v503
        %v505 = vmul.f32 %v504, 0.080537446
        %v506 = vsub.f32 %v505, 0.13877685
        %v507 = vmul.f32 %v506, %v504
        %v508 = vadd.f32 %v507, 0.19977711
        %v509 = vmul.f32 %v508, %v504
        %v510 = vsub.f32 %v509, 0.3333295
        %v511 = vmul.f32 %v510, %v504
        %v512 = vmul.f32 %v511, %v503
        %v513 = vadd.f32 %v488, %v512
        %v514 = vadd.f32 %v513, %v503
        %v515 = vmul.f32 %v481, %v514
        %v516 = vmul.f32 %v515, 0.40528473
        %v517 = vmul.f32 %v516, %v515
        %v518 = vsub.f32 1.0, %v445
        %v519 = vadd.f32 %v518, %v517
        %v520 = vrcp.pop %v519
        %v521 = vmul.f32 %v519, %v520
        %v522 = vsub.f32 2.0, %v521
        %v523 = vmul.f32 %v520, %v522
        %v524 = vmul.f32 %v517, %v523
        %v525 = vrcp.pop %v454
        %v526 = vmul.f32 %v454, %v525
        %v527 = vsub.f32 2.0, %v526
        %v528 = vmul.f32 %v525, %v527
        %v529 = vmul.f32 %v459, %v528
        %v530 = vsub.f32 %v445, %v529
        %v531 = vmul.f32 %v524, %v517
        %v532 = vsub.f32 %v530, %v531
        %v533 = vmul.f32 %v363, %v365
        %v534 = vmul.f32 %v533, 6.1035156e-05
        %v535 = vsub.f32 2.0, %v534
        %v536 = vmul.f32 %v367, %v535
        %v537 = vsub.f32 1.0, %v532
        %v538 = vmul.f32 %v536, %v537
        %s539 = scalar_lea.vmem %s328, 40
        %v540 = vld [vmem:[%s539] sm:$0x3f]
        %s541 = scalar_lea.vmem %s336, 40
        %v542 = vld [vmem:[%s541] sm:$0x3f]
        %v543 = vmax.f32 %v540, 0.0
        %v544 = vand.u32 2147483647, %v540
        %v545 = vsub.f32 0.0, %v544
        %v546 = vmul.f32 %v545, 1.442695
        %v547 = vpow.pop %v546
        %v548 = vadd.f32 %v547, 1.0
        %v549 = vlog2.pop %v548
        %v550 = vmul.f32 %v549, 0.6931472
        %v551 = vadd.f32 %v543, %v550
        %v552 = vmul.f32 %v542, %v540
        %v553 = vsub.f32 %v551, %v552
        %v554 = vadd.f32 %v553, 0.0
        %s555 = scalar_lea.vmem %s328, 48
        %v556 = vld [vmem:[%s555] sm:$0x3f]
        %s557 = scalar_lea.vmem %s336, 48
        %v558 = vld [vmem:[%s557] sm:$0x3f]
        %v559 = vmax.f32 %v556, 0.0
        %v560 = vand.u32 2147483647, %v556
        %v561 = vsub.f32 0.0, %v560
        %v562 = vmul.f32 %v561, 1.442695
        %v563 = vpow.pop %v562
        %v564 = vadd.f32 %v563, 1.0
        %v565 = vlog2.pop %v564
        %v566 = vmul.f32 %v565, 0.6931472
        %v567 = vadd.f32 %v559, %v566
        %v568 = vmul.f32 %v558, %v556
        %v569 = vsub.f32 %v567, %v568
        %v570 = vadd.f32 %v554, %v569
        %s571 = scalar_lea.vmem %s328, 56
        %v572 = vld [vmem:[%s571] sm:$0x3f]
        %s573 = scalar_lea.vmem %s336, 56
        %v574 = vld [vmem:[%s573] sm:$0x3f]
        %v575 = vmax.f32 %v572, 0.0
        %v576 = vand.u32 2147483647, %v572
        %v577 = vsub.f32 0.0, %v576
        %v578 = vmul.f32 %v577, 1.442695
        %v579 = vpow.pop %v578
        %v580 = vadd.f32 %v579, 1.0
        %v581 = vlog2.pop %v580
        %v582 = vmul.f32 %v581, 0.6931472
        %v583 = vadd.f32 %v575, %v582
        %v584 = vmul.f32 %v574, %v572
        %v585 = vsub.f32 %v583, %v584
        %v586 = vadd.f32 %v570, %v585
        %s587 = scalar_lea.vmem %s328, 64
        %v588 = vld [vmem:[%s587] sm:$0x3f]
        %s589 = scalar_lea.vmem %s336, 64
        %v590 = vld [vmem:[%s589] sm:$0x3f]
        %v591 = vmax.f32 %v588, 0.0
        %v592 = vand.u32 2147483647, %v588
        %v593 = vsub.f32 0.0, %v592
        %v594 = vmul.f32 %v593, 1.442695
        %v595 = vpow.pop %v594
        %v596 = vadd.f32 %v595, 1.0
        %v597 = vlog2.pop %v596
        %v598 = vmul.f32 %v597, 0.6931472
        %v599 = vadd.f32 %v591, %v598
        %v600 = vmul.f32 %v590, %v588
        %v601 = vsub.f32 %v599, %v600
        %v602 = vadd.f32 %v586, %v601
        %v603 = vmul.f32 %v367, %v602
        %v604 = vmul.f32 %v399, %v402
        %s605 = smul.u32 %s23, 32
        %s606 = sld [smem:[#allocation2 + %s605]]
        %s607 = sadd.s32 %s605, 1
        %s608 = sld [smem:[#allocation2 + %s607]]
        %s609 = sadd.s32 %s605, 2
        %s610 = sld [smem:[#allocation2 + %s609]]
        %s611 = sadd.s32 %s605, 3
        %s612 = sld [smem:[#allocation2 + %s611]]
        %s613 = smul.f32 %s610, 0.5
        %s614 = ssub.f32 %s606, %s613
        %s615 = sadd.f32 %s606, %s613
        %s616 = smul.f32 %s612, 0.5
        %s617 = ssub.f32 %s608, %s616
        %s618 = sadd.f32 %s608, %s616
        %v619 = vstv %s615
        %v620 = vmin.f32 %v405, %v619
        %v621 = vstv %s614
        %v622 = vmax.f32 %v404, %v621
        %v623 = vsub.f32 %v620, %v622
        %v624 = vmax.f32 %v623, 0.0
        %v625 = vstv %s618
        %v626 = vmin.f32 %v408, %v625
        %v627 = vstv %s617
        %v628 = vmax.f32 %v407, %v627
        %v629 = vsub.f32 %v626, %v628
        %v630 = vmax.f32 %v629, 0.0
        %v631 = vmul.f32 %v624, %v630
        %s632 = smul.f32 %s610, %s612
        %v633 = vstv %s632
        %v634 = vadd.f32 %v604, %v633
        %v635 = vsub.f32 %v634, %v631
        %v636 = vrcp.pop %v635
        %v637 = vmul.f32 %v635, %v636
        %v638 = vsub.f32 2.0, %v637
        %v639 = vmul.f32 %v636, %v638
        %v640 = vmul.f32 %v631, %v639
        %v641 = vmax.f32 %v640, 0.0
        %s642 = sadd.s32 %s605, 4
        %s643 = sld [smem:[#allocation2 + %s642]]
        %s644 = sadd.s32 %s605, 5
        %s645 = sld [smem:[#allocation2 + %s644]]
        %s646 = sadd.s32 %s605, 6
        %s647 = sld [smem:[#allocation2 + %s646]]
        %s648 = sadd.s32 %s605, 7
        %s649 = sld [smem:[#allocation2 + %s648]]
        %s650 = smul.f32 %s647, 0.5
        %s651 = ssub.f32 %s643, %s650
        %s652 = sadd.f32 %s643, %s650
        %s653 = smul.f32 %s649, 0.5
        %s654 = ssub.f32 %s645, %s653
        %s655 = sadd.f32 %s645, %s653
        %v656 = vstv %s652
        %v657 = vmin.f32 %v405, %v656
        %v658 = vstv %s651
        %v659 = vmax.f32 %v404, %v658
        %v660 = vsub.f32 %v657, %v659
        %v661 = vmax.f32 %v660, 0.0
        %v662 = vstv %s655
        %v663 = vmin.f32 %v408, %v662
        %v664 = vstv %s654
        %v665 = vmax.f32 %v407, %v664
        %v666 = vsub.f32 %v663, %v665
        %v667 = vmax.f32 %v666, 0.0
        %v668 = vmul.f32 %v661, %v667
        %s669 = smul.f32 %s647, %s649
        %v670 = vstv %s669
        %v671 = vadd.f32 %v604, %v670
        %v672 = vsub.f32 %v671, %v668
        %v673 = vrcp.pop %v672
        %v674 = vmul.f32 %v672, %v673
        %v675 = vsub.f32 2.0, %v674
        %v676 = vmul.f32 %v673, %v675
        %v677 = vmul.f32 %v668, %v676
        %v678 = vmax.f32 %v641, %v677
        %s679 = sadd.s32 %s605, 8
        %s680 = sld [smem:[#allocation2 + %s679]]
        %s681 = sadd.s32 %s605, 9
        %s682 = sld [smem:[#allocation2 + %s681]]
        %s683 = sadd.s32 %s605, 10
        %s684 = sld [smem:[#allocation2 + %s683]]
        %s685 = sadd.s32 %s605, 11
        %s686 = sld [smem:[#allocation2 + %s685]]
        %s687 = smul.f32 %s684, 0.5
        %s688 = ssub.f32 %s680, %s687
        %s689 = sadd.f32 %s680, %s687
        %s690 = smul.f32 %s686, 0.5
        %s691 = ssub.f32 %s682, %s690
        %s692 = sadd.f32 %s682, %s690
        %v693 = vstv %s689
        %v694 = vmin.f32 %v405, %v693
        %v695 = vstv %s688
        %v696 = vmax.f32 %v404, %v695
        %v697 = vsub.f32 %v694, %v696
        %v698 = vmax.f32 %v697, 0.0
        %v699 = vstv %s692
        %v700 = vmin.f32 %v408, %v699
        %v701 = vstv %s691
        %v702 = vmax.f32 %v407, %v701
        %v703 = vsub.f32 %v700, %v702
        %v704 = vmax.f32 %v703, 0.0
        %v705 = vmul.f32 %v698, %v704
        %s706 = smul.f32 %s684, %s686
        %v707 = vstv %s706
        %v708 = vadd.f32 %v604, %v707
        %v709 = vsub.f32 %v708, %v705
        %v710 = vrcp.pop %v709
        %v711 = vmul.f32 %v709, %v710
        %v712 = vsub.f32 2.0, %v711
        %v713 = vmul.f32 %v710, %v712
        %v714 = vmul.f32 %v705, %v713
        %v715 = vmax.f32 %v678, %v714
        %s716 = sadd.s32 %s605, 12
        %s717 = sld [smem:[#allocation2 + %s716]]
        %s718 = sadd.s32 %s605, 13
        %s719 = sld [smem:[#allocation2 + %s718]]
        %s720 = sadd.s32 %s605, 14
        %s721 = sld [smem:[#allocation2 + %s720]]
        %s722 = sadd.s32 %s605, 15
        %s723 = sld [smem:[#allocation2 + %s722]]
        %s724 = smul.f32 %s721, 0.5
        %s725 = ssub.f32 %s717, %s724
        %s726 = sadd.f32 %s717, %s724
        %s727 = smul.f32 %s723, 0.5
        %s728 = ssub.f32 %s719, %s727
        %s729 = sadd.f32 %s719, %s727
        %v730 = vstv %s726
        %v731 = vmin.f32 %v405, %v730
        %v732 = vstv %s725
        %v733 = vmax.f32 %v404, %v732
        %v734 = vsub.f32 %v731, %v733
        %v735 = vmax.f32 %v734, 0.0
        %v736 = vstv %s729
        %v737 = vmin.f32 %v408, %v736
        %v738 = vstv %s728
        %v739 = vmax.f32 %v407, %v738
        %v740 = vsub.f32 %v737, %v739
        %v741 = vmax.f32 %v740, 0.0
        %v742 = vmul.f32 %v735, %v741
        %s743 = smul.f32 %s721, %s723
        %v744 = vstv %s743
        %v745 = vadd.f32 %v604, %v744
        %v746 = vsub.f32 %v745, %v742
        %v747 = vrcp.pop %v746
        %v748 = vmul.f32 %v746, %v747
        %v749 = vsub.f32 2.0, %v748
        %v750 = vmul.f32 %v747, %v749
        %v751 = vmul.f32 %v742, %v750
        %v752 = vmax.f32 %v715, %v751
        %s753 = sadd.s32 %s605, 16
        %s754 = sld [smem:[#allocation2 + %s753]]
        %s755 = sadd.s32 %s605, 17
        %s756 = sld [smem:[#allocation2 + %s755]]
        %s757 = sadd.s32 %s605, 18
        %s758 = sld [smem:[#allocation2 + %s757]]
        %s759 = sadd.s32 %s605, 19
        %s760 = sld [smem:[#allocation2 + %s759]]
        %s761 = smul.f32 %s758, 0.5
        %s762 = ssub.f32 %s754, %s761
        %s763 = sadd.f32 %s754, %s761
        %s764 = smul.f32 %s760, 0.5
        %s765 = ssub.f32 %s756, %s764
        %s766 = sadd.f32 %s756, %s764
        %v767 = vstv %s763
        %v768 = vmin.f32 %v405, %v767
        %v769 = vstv %s762
        %v770 = vmax.f32 %v404, %v769
        %v771 = vsub.f32 %v768, %v770
        %v772 = vmax.f32 %v771, 0.0
        %v773 = vstv %s766
        %v774 = vmin.f32 %v408, %v773
        %v775 = vstv %s765
        %v776 = vmax.f32 %v407, %v775
        %v777 = vsub.f32 %v774, %v776
        %v778 = vmax.f32 %v777, 0.0
        %v779 = vmul.f32 %v772, %v778
        %s780 = smul.f32 %s758, %s760
        %v781 = vstv %s780
        %v782 = vadd.f32 %v604, %v781
        %v783 = vsub.f32 %v782, %v779
        %v784 = vrcp.pop %v783
        %v785 = vmul.f32 %v783, %v784
        %v786 = vsub.f32 2.0, %v785
        %v787 = vmul.f32 %v784, %v786
        %v788 = vmul.f32 %v779, %v787
        %v789 = vmax.f32 %v752, %v788
        %s790 = sadd.s32 %s605, 20
        %s791 = sld [smem:[#allocation2 + %s790]]
        %s792 = sadd.s32 %s605, 21
        %s793 = sld [smem:[#allocation2 + %s792]]
        %s794 = sadd.s32 %s605, 22
        %s795 = sld [smem:[#allocation2 + %s794]]
        %s796 = sadd.s32 %s605, 23
        %s797 = sld [smem:[#allocation2 + %s796]]
        %s798 = smul.f32 %s795, 0.5
        %s799 = ssub.f32 %s791, %s798
        %s800 = sadd.f32 %s791, %s798
        %s801 = smul.f32 %s797, 0.5
        %s802 = ssub.f32 %s793, %s801
        %s803 = sadd.f32 %s793, %s801
        %v804 = vstv %s800
        %v805 = vmin.f32 %v405, %v804
        %v806 = vstv %s799
        %v807 = vmax.f32 %v404, %v806
        %v808 = vsub.f32 %v805, %v807
        %v809 = vmax.f32 %v808, 0.0
        %v810 = vstv %s803
        %v811 = vmin.f32 %v408, %v810
        %v812 = vstv %s802
        %v813 = vmax.f32 %v407, %v812
        %v814 = vsub.f32 %v811, %v813
        %v815 = vmax.f32 %v814, 0.0
        %v816 = vmul.f32 %v809, %v815
        %s817 = smul.f32 %s795, %s797
        %v818 = vstv %s817
        %v819 = vadd.f32 %v604, %v818
        %v820 = vsub.f32 %v819, %v816
        %v821 = vrcp.pop %v820
        %v822 = vmul.f32 %v820, %v821
        %v823 = vsub.f32 2.0, %v822
        %v824 = vmul.f32 %v821, %v823
        %v825 = vmul.f32 %v816, %v824
        %v826 = vmax.f32 %v789, %v825
        %s827 = sadd.s32 %s605, 24
        %s828 = sld [smem:[#allocation2 + %s827]]
        %s829 = sadd.s32 %s605, 25
        %s830 = sld [smem:[#allocation2 + %s829]]
        %s831 = sadd.s32 %s605, 26
        %s832 = sld [smem:[#allocation2 + %s831]]
        %s833 = sadd.s32 %s605, 27
        %s834 = sld [smem:[#allocation2 + %s833]]
        %s835 = smul.f32 %s832, 0.5
        %s836 = ssub.f32 %s828, %s835
        %s837 = sadd.f32 %s828, %s835
        %s838 = smul.f32 %s834, 0.5
        %s839 = ssub.f32 %s830, %s838
        %s840 = sadd.f32 %s830, %s838
        %v841 = vstv %s837
        %v842 = vmin.f32 %v405, %v841
        %v843 = vstv %s836
        %v844 = vmax.f32 %v404, %v843
        %v845 = vsub.f32 %v842, %v844
        %v846 = vmax.f32 %v845, 0.0
        %v847 = vstv %s840
        %v848 = vmin.f32 %v408, %v847
        %v849 = vstv %s839
        %v850 = vmax.f32 %v407, %v849
        %v851 = vsub.f32 %v848, %v850
        %v852 = vmax.f32 %v851, 0.0
        %v853 = vmul.f32 %v846, %v852
        %s854 = smul.f32 %s832, %s834
        %v855 = vstv %s854
        %v856 = vadd.f32 %v604, %v855
        %v857 = vsub.f32 %v856, %v853
        %v858 = vrcp.pop %v857
        %v859 = vmul.f32 %v857, %v858
        %v860 = vsub.f32 2.0, %v859
        %v861 = vmul.f32 %v858, %v860
        %v862 = vmul.f32 %v853, %v861
        %v863 = vmax.f32 %v826, %v862
        %s864 = sadd.s32 %s605, 28
        %s865 = sld [smem:[#allocation2 + %s864]]
        %s866 = sadd.s32 %s605, 29
        %s867 = sld [smem:[#allocation2 + %s866]]
        %s868 = sadd.s32 %s605, 30
        %s869 = sld [smem:[#allocation2 + %s868]]
        %s870 = sadd.s32 %s605, 31
        %s871 = sld [smem:[#allocation2 + %s870]]
        %s872 = smul.f32 %s869, 0.5
        %s873 = ssub.f32 %s865, %s872
        %s874 = sadd.f32 %s865, %s872
        %s875 = smul.f32 %s871, 0.5
        %s876 = ssub.f32 %s867, %s875
        %s877 = sadd.f32 %s867, %s875
        %v878 = vstv %s874
        %v879 = vmin.f32 %v405, %v878
        %v880 = vstv %s873
        %v881 = vmax.f32 %v404, %v880
        %v882 = vsub.f32 %v879, %v881
        %v883 = vmax.f32 %v882, 0.0
        %v884 = vstv %s877
        %v885 = vmin.f32 %v408, %v884
        %v886 = vstv %s876
        %v887 = vmax.f32 %v407, %v886
        %v888 = vsub.f32 %v885, %v887
        %v889 = vmax.f32 %v888, 0.0
        %v890 = vmul.f32 %v883, %v889
        %s891 = smul.f32 %s869, %s871
        %v892 = vstv %s891
        %v893 = vadd.f32 %v604, %v892
        %v894 = vsub.f32 %v893, %v890
        %v895 = vrcp.pop %v894
        %v896 = vmul.f32 %v894, %v895
        %v897 = vsub.f32 2.0, %v896
        %v898 = vmul.f32 %v895, %v897
        %v899 = vmul.f32 %v890, %v898
        %v900 = vmax.f32 %v863, %v899
        %v901 = vsub.f32 1.0, %v367
        %v902 = vmul.f32 %v901, %v376
        %vm903 = vcmp.lt.f32.partialorder %v900, 0.5
        %v904 = vsel %vm903, 1, 0
        %v905 = vcvt.s32.f32 %v904
        %v906 = vmul.f32 %v902, %v905
        %v907 = vmax.f32 %v358, 0.0
        %v908 = vand.u32 2147483647, %v358
        %v909 = vsub.f32 0.0, %v908
        %v910 = vmul.f32 %v909, 1.442695
        %v911 = vpow.pop %v910
        %v912 = vadd.f32 %v911, 1.0
        %v913 = vlog2.pop %v912
        %v914 = vmul.f32 %v913, 0.6931472
        %v915 = vadd.f32 %v907, %v914
        %v916 = vsub.f32 %v915, %v358
        %v917 = vmul.f32 %v367, %v916
        %v918 = vmul.f32 %v906, %v915
        %v919 = vadd.f32 %v917, %v918
        %vm920 = vcmask 1045504
        %v921 = vsel %vm920, %v538, 0.0
        %922 = vadd.xlane.f32.xlu0 %v921
        %v923 = vpop.xlane.xlu0 %922
        %v924 = vrot.slane %v923, 4
        %v925 = vadd.f32 %v923, %v924
        %v926 = vrot.slane %v925, 2
        %v927 = vadd.f32 %v925, %v926
        %v928 = vrot.slane %v927, 1
        %v929 = vadd.f32 %v927, %v928
        %s930 = vtos %v929
        %v931 = vstv %s930
        %v932 = vsel %vm920, %v919, 0.0
        %933 = vadd.xlane.f32.xlu0 %v932
        %v934 = vpop.xlane.xlu0 %933
        %v935 = vrot.slane %v934, 4
        %v936 = vadd.f32 %v934, %v935
        %v937 = vrot.slane %v936, 2
        %v938 = vadd.f32 %v936, %v937
        %v939 = vrot.slane %v938, 1
        %v940 = vadd.f32 %v938, %v939
        %s941 = vtos %v940
        %v942 = vstv %s941
        %v943 = vsel %vm920, %v603, 0.0
        %944 = vadd.xlane.f32.xlu0 %v943
        %v945 = vpop.xlane.xlu0 %944
        %v946 = vrot.slane %v945, 4
        %v947 = vadd.f32 %v945, %v946
        %v948 = vrot.slane %v947, 2
        %v949 = vadd.f32 %v947, %v948
        %v950 = vrot.slane %v949, 1
        %v951 = vadd.f32 %v949, %v950
        %s952 = vtos %v951
        %v953 = vstv %s952
        %p954 = scmp.eq.s32.totalorder %s24, 0
        // Predicated region
        $region41: #{tpu_custom_call.1} parent=35 // pred_check
          %p955 = pneg %p954
        $region42: #{tpu_custom_call.1} parent=35 // pred_check_branch
          %957 = sbr.rel (%p955) target = $region44
        $region43: #{tpu_custom_call.1} parent=35 // pred_region
          %vm958 = vcmask 0
          %959 = vst.msk [vmem:[%s343] sm:$0x1] %vm958, %v931
          %960 = vst.msk [vmem:[%s346] sm:$0x1] %vm958, %v942
          %961 = vst.msk [vmem:[%s349] sm:$0x1] %vm958, %v953
        $region44: #{tpu_custom_call.1} parent=35 // pred_fallthru
          _
        %p962 = scmp.gt.s32.totalorder %s24, 0
        // Predicated region
        $region45: #{tpu_custom_call.1} parent=35 // pred_check
          %p963 = pneg %p962
        $region46: #{tpu_custom_call.1} parent=35 // pred_check_branch
          %965 = sbr.rel (%p963) target = $region48
        $region47: #{tpu_custom_call.1} parent=35 // pred_region
          %v966 = vld [vmem:[%s343] sm:$0x1]
          %v967 = vadd.f32 %v966, %v931
          %vm968 = vcmask 0
          %969 = vst.msk [vmem:[%s343] sm:$0x1] %vm968, %v967
          %v970 = vld [vmem:[%s346] sm:$0x1]
          %v971 = vadd.f32 %v970, %v942
          %972 = vst.msk [vmem:[%s346] sm:$0x1] %vm968, %v971
          %v973 = vld [vmem:[%s349] sm:$0x1]
          %v974 = vadd.f32 %v973, %v953
          %975 = vst.msk [vmem:[%s349] sm:$0x1] %vm968, %v974
        $region48: #{tpu_custom_call.1} parent=35 // pred_fallthru
          _
        %p976 = scmp.lt.s32.totalorder %s23, 1
        %s977 = scalar_select %p976, %s23, 1
        %s978 = scalar_lea.vmem %s4, %s977
        %p979 = scmp.lt.s32.totalorder %s23, 1
        %s980 = scalar_select %p979, %s23, 1
        %s981 = scalar_lea.vmem %s5, %s980
        %p982 = scmp.lt.s32.totalorder %s23, 1
        %s983 = scalar_select %p982, %s23, 1
        %s984 = scalar_lea.vmem %s6, %s983
        // Predicated region
        $region49: #{tpu_custom_call.1} parent=35 // pred_check
          %p985 = pneg %p152
        $region50: #{tpu_custom_call.1} parent=35 // pred_check_branch
          %987 = sbr.rel (%p985) target = $region52
        $region51: #{tpu_custom_call.1} parent=35 // pred_region
          _
        $region52: #{tpu_custom_call.1} parent=35 // pred_fallthru
          _
        // Predicated region
        $region53: #{tpu_custom_call.1} parent=35 // pred_check
          %p988 = pneg %p178
        $region54: #{tpu_custom_call.1} parent=35 // pred_check_branch
          %990 = sbr.rel (%p988) target = $region56
        $region55: #{tpu_custom_call.1} parent=35 // pred_region
          _
        $region56: #{tpu_custom_call.1} parent=35 // pred_fallthru
          _
        // Predicated region
        $region57: #{tpu_custom_call.1} parent=35 // pred_check
          %p991 = pneg %p204
        $region58: #{tpu_custom_call.1} parent=35 // pred_check_branch
          %993 = sbr.rel (%p991) target = $region60
        $region59: #{tpu_custom_call.1} parent=35 // pred_region
          _
        $region60: #{tpu_custom_call.1} parent=35 // pred_fallthru
          _
      $region36: #{tpu_custom_call.1} parent=5 // pred_fallthru
        _
      %p994 = scmp.le.s32.totalorder 2, %s14
      // Predicated region
      $region61: #{tpu_custom_call.1} parent=5 // pred_check
        %p995 = pneg %p994
      $region62: #{tpu_custom_call.1} parent=5 // pred_check_branch
        %997 = sbr.rel (%p995) target = $region64
      $region63: #{tpu_custom_call.1} parent=5 // pred_region
        %s998 = ssub.s32 %s14, 2
        // Predicated region
        $region65: #{tpu_custom_call.1} parent=63 // pred_check
          %p999 = pneg %p158
        $region66: #{tpu_custom_call.1} parent=63 // pred_check_branch
          %1001 = sbr.rel (%p999) target = $region68
        $region67: #{tpu_custom_call.1} parent=63 // pred_region
          %p1002 = scmp.lt.s32.totalorder %s25, 1
          %s1003 = scalar_select %p1002, %s25, 1
          %s1004 = scalar_lea.vmem %s4, %s1003
        $region68: #{tpu_custom_call.1} parent=63 // pred_fallthru
          _
        // Predicated region
        $region69: #{tpu_custom_call.1} parent=63 // pred_check
          %p1005 = pneg %p184
        $region70: #{tpu_custom_call.1} parent=63 // pred_check_branch
          %1007 = sbr.rel (%p1005) target = $region72
        $region71: #{tpu_custom_call.1} parent=63 // pred_region
          %p1008 = scmp.lt.s32.totalorder %s25, 1
          %s1009 = scalar_select %p1008, %s25, 1
          %s1010 = scalar_lea.vmem %s5, %s1009
        $region72: #{tpu_custom_call.1} parent=63 // pred_fallthru
          _
        // Predicated region
        $region73: #{tpu_custom_call.1} parent=63 // pred_check
          %p1011 = pneg %p210
        $region74: #{tpu_custom_call.1} parent=63 // pred_check_branch
          %1013 = sbr.rel (%p1011) target = $region76
        $region75: #{tpu_custom_call.1} parent=63 // pred_region
          %p1014 = scmp.lt.s32.totalorder %s25, 1
          %s1015 = scalar_select %p1014, %s25, 1
          %s1016 = scalar_lea.vmem %s6, %s1015
        $region76: #{tpu_custom_call.1} parent=63 // pred_fallthru
          _
      $region64: #{tpu_custom_call.1} parent=5 // pred_fallthru
        _
    $region6: #{tpu_custom_call.1} parent=1 // loop_footer
      %s18 = sadd.s32 1, %s14
    $region7: #{tpu_custom_call.1} parent=1 // loop_footer_branch
      %13 = sbr.rel target = $region3
    $region8: #{tpu_custom_call.1} parent=1 // loop_exit
      _
    %1017 = vsyncpa [#allocation3], 1
    %s1018 = scalar_lea.sflag [#allocation3], 1
    %1019 = vsyncpa %s1018, 1

</llo_original>
